<compile_context>
chip_gen: v6e
topology: v6e:2x2x1
jax: 0.10.0
libtpu: 0.0.40
codegen_flags: <defaults>
</compile_context>

<pallas_src>
import functools

import jax
import jax.numpy as jnp
from jax.experimental import pallas as pl
from jax.experimental.pallas import tpu as pltpu


def _erf_poly(x):
    # Abramowitz & Stegun 7.1.26 (|err| <= 1.5e-7): only mul/add/exp/div, all of which
    # lower cleanly in Mosaic. Matches PyTorch's exact (erf-based) gelu to ~1e-7.
    a1, a2, a3, a4, a5 = 0.254829592, -0.284496736, 1.421413741, -1.453152027, 1.061405429
    p = 0.3275911
    sign = jnp.where(x >= 0.0, 1.0, -1.0)
    ax = jnp.abs(x)
    t = 1.0 / (1.0 + p * ax)
    poly = ((((a5 * t + a4) * t + a3) * t + a2) * t + a1) * t
    return sign * (1.0 - poly * jnp.exp(-ax * ax))


def _gelu_exact(x):
    # PyTorch nn.functional.gelu default: 0.5 * x * (1 + erf(x / sqrt(2)))
    return 0.5 * x * (1.0 + _erf_poly(x * 0.7071067811865476))


def table_filling_kernel(enc_tile_ref, enc_full_ref,
                         w_head_ref, b_head_ref, w_tail_ref, b_tail_ref,
                         u11_ref, u12_ref, u21_ref, u22_ref,
                         w_ne_ref, b_ne_ref,
                         sm_ref, ne_ref,
                         scores_ref, *, biaff_dim, qg_tag_size):
    D = biaff_dim
    L = qg_tag_size
    enc_t = enc_tile_ref[0]                               # (tS, H) bf16 — this tile's rows
    enc_f = enc_full_ref[0]                               # (S,  H) bf16 — full sequence

    # --- NE classifier (Linear, lanes padded to 128-multiple in the wrapper) ---
    ne = jnp.dot(enc_t, w_ne_ref[...], preferred_element_type=jnp.float32) + b_ne_ref[...]
    ne_ref[0] = ne

    # --- fc_head / fc_tail (Linear + gelu; dropout = identity, eval) ---
    head = _gelu_exact(
        jnp.dot(enc_t, w_head_ref[...], preferred_element_type=jnp.float32) + b_head_ref[...])
    tail = _gelu_exact(
        jnp.dot(enc_f, w_tail_ref[...], preferred_element_type=jnp.float32) + b_tail_ref[...])
    head_b = head.astype(jnp.bfloat16)                    # (tS, D)
    tail_t = jnp.transpose(tail).astype(jnp.bfloat16)     # (D, S)  — single transpose, hoisted

    # --- biaffine with wrapper-side decomposition of biaff_U = [[U11, u12], [u21, u22]]:
    #     s_l = head @ U11_l @ tail^T + (head @ u12_l) ⊕ (u21_l @ tail^T) + u22_l
    hu = jnp.dot(head_b, u11_ref[...], preferred_element_type=jnp.float32)      # (tS, L*D)
    hcol = jnp.dot(head_b, u12_ref[...], preferred_element_type=jnp.float32)    # (tS, L)
    rrow = (jnp.dot(u21_ref[...], tail_t, preferred_element_type=jnp.float32)
            + u22_ref[...])                                                     # (L, S)

    for l in range(L):                                     # L is static — unrolled
        hu_l = hu[:, l * D:(l + 1) * D].astype(jnp.bfloat16)
        s_l = jnp.dot(hu_l, tail_t, preferred_element_type=jnp.float32)         # (tS, S)
        s_l = s_l + hcol[:, l:l + 1] + rrow[l:l + 1, :]
        scores_ref[l] = s_l                                # stage raw scores in VMEM scratch

    # --- softmax over the label axis, staged through scores_ref (O(1) live tiles) ---
    m = scores_ref[0]
    for l in range(1, L):
        m = jnp.maximum(m, scores_ref[l])
    denom = jnp.zeros_like(m)
    for l in range(L):
        e = jnp.exp(scores_ref[l] - m)
        scores_ref[l] = e
        denom = denom + e
    inv = pl.reciprocal(denom, approx=True)
    for l in range(L):
        sm_ref[0, l] = (scores_ref[l] * inv).astype(sm_ref.dtype)


def _nbytes(shape, itemsize):
    n = 1
    for d in shape:
        n *= d
    return n * itemsize


def table_filling_forward(enc_output, params, *, qg_tag_size, seq_block=None):
    """Pallas hot path.

    Returns:
      sm_biaff_scores : (B, L, S, S) bf16  — lane-dense layout (transpose of torch's 'bxyl');
                                             the wrapper intentionally does NOT transpose.
      ne_logits       : (B, S, NE)   f32
    """
    B, S, H = enc_output.shape
    D = params["w_head"].shape[1]
    NE = params["w_ne"].shape[1]
    L = qg_tag_size

    # Sequence tiling (mandatory on v7x's 64 MiB VMEM at realistic S; harmless at small S).
    if seq_block is None:
        seq_block = S if S <= 256 else 256
    tS = seq_block
    assert S % tS == 0, "TODO(synk): ragged sequence tiles not handled"
    nS = S // tS

    NEp = ((NE + 127) // 128) * 128            # pad NE lanes to a 128 multiple

    bf16 = jnp.bfloat16
    f32 = jnp.float32

    # --- pre-decompose biaff_U (no in-kernel (D+1)-wide lane slices) ---
    U = params["biaff_U"].astype(f32)                                   # (L, D+1, D+1)
    u11 = jnp.transpose(U[:, :D, :D], (1, 0, 2)).reshape(D, L * D)      # (D, L*D) label-stacked
    u12 = jnp.transpose(U[:, :D, D])                                    # (D, L)
    u21 = U[:, D, :D]                                                   # (L, D)
    u22 = U[:, D, D].reshape(L, 1)                                      # (L, 1)

    # --- bf16 MXU operands (f32 accumulation inside the kernel) ---
    enc_bf = enc_output.astype(bf16)
    w_head_bf = params["w_head"].astype(bf16)
    w_tail_bf = params["w_tail"].astype(bf16)
    b_head = params["b_head"].reshape(1, D).astype(f32)
    b_tail = params["b_tail"].reshape(1, D).astype(f32)
    u11_bf, u12_bf, u21_bf = u11.astype(bf16), u12.astype(bf16), u21.astype(bf16)
    w_ne_pad = jnp.zeros((H, NEp), bf16).at[:, :NE].set(params["w_ne"].astype(bf16))
    b_ne_pad = jnp.zeros((1, NEp), f32).at[:, :NE].set(params["b_ne"].reshape(1, NE).astype(f32))

    kernel = functools.partial(table_filling_kernel, biaff_dim=D, qg_tag_size=L)

    # --- explicit scoped-VMEM budget from the chosen block shapes (double-buffered) ---
    est = 2 * (_nbytes((1, tS, H), 2) + _nbytes((1, S, H), 2)
               + 2 * _nbytes((H, D), 2) + 2 * _nbytes((1, D), 4)
               + _nbytes((D, L * D), 2) + _nbytes((D, L), 2)
               + _nbytes((L, D), 2) + _nbytes((L, 1), 4)
               + _nbytes((H, NEp), 2) + _nbytes((1, NEp), 4)
               + _nbytes((1, L, tS, S), 2) + _nbytes((1, tS, NEp), 4))
    est += _nbytes((L, tS, S), 4)                      # softmax staging scratch
    vmem_limit = int(min(max(2 * est + (4 << 20), 16 << 20), 48 << 20))

    sm_blss, ne_pad = pl.pallas_call(
        kernel,
        out_shape=(jax.ShapeDtypeStruct((B, L, S, S), bf16),
                   jax.ShapeDtypeStruct((B, S, NEp), f32)),
        grid_spec=pltpu.PrefetchScalarGridSpec(
            num_scalar_prefetch=0,
            grid=(B, nS),
            in_specs=[
                pl.BlockSpec((1, tS, H), lambda b, i: (b, i, 0)),     # enc tile (head rows)
                pl.BlockSpec((1, S, H), lambda b, i: (b, 0, 0)),      # enc full (tail rows)
                pl.BlockSpec((H, D), lambda b, i: (0, 0)),            # w_head
                pl.BlockSpec((1, D), lambda b, i: (0, 0)),            # b_head
                pl.BlockSpec((H, D), lambda b, i: (0, 0)),            # w_tail
                pl.BlockSpec((1, D), lambda b, i: (0, 0)),            # b_tail
                pl.BlockSpec((D, L * D), lambda b, i: (0, 0)),        # U11 label-stacked
                pl.BlockSpec((D, L), lambda b, i: (0, 0)),            # u12
                pl.BlockSpec((L, D), lambda b, i: (0, 0)),            # u21
                pl.BlockSpec((L, 1), lambda b, i: (0, 0)),            # u22
                pl.BlockSpec((H, NEp), lambda b, i: (0, 0)),          # w_ne (padded)
                pl.BlockSpec((1, NEp), lambda b, i: (0, 0)),          # b_ne (padded)
            ],
            out_specs=[
                pl.BlockSpec((1, L, tS, S), lambda b, i: (b, 0, i, 0)),
                pl.BlockSpec((1, tS, NEp), lambda b, i: (b, i, 0)),
            ],
            scratch_shapes=[pltpu.VMEM((L, tS, S), f32)],
        ),
        compiler_params=pltpu.CompilerParams(
            dimension_semantics=("parallel", "parallel"),
            vmem_limit_bytes=vmem_limit),
    )(enc_bf, enc_bf,
      w_head_bf, b_head, w_tail_bf, b_tail,
      u11_bf, u12_bf, u21_bf, u22,
      w_ne_pad, b_ne_pad)

    ne_logits = ne_pad[:, :, :NE]
    return sm_blss, ne_logits


def reference_forward(enc_output, params):
    """Pure-JAX f32 reference (exact erf gelu), torch layout 'bxyl'."""
    head = jax.nn.gelu(enc_output @ params["w_head"] + params["b_head"], approximate=False)
    tail = jax.nn.gelu(enc_output @ params["w_tail"] + params["b_tail"], approximate=False)
    ones = jnp.ones(head.shape[:-1] + (1,), head.dtype)
    head_aug = jnp.concatenate([head, ones], axis=-1)
    tail_aug = jnp.concatenate([tail, ones], axis=-1)
    scores = jnp.einsum("bxi,lij,byj->bxyl", head_aug, params["biaff_U"], tail_aug)
    sm = jax.nn.softmax(scores, axis=-1)
    ne = enc_output @ params["w_ne"] + params["b_ne"]
    return sm, ne


if __name__ == "__main__":
    # Small, module-consistent shapes.
    B, S = 2, 8            # batch, sequence length
    H = 32                 # encoder hidden size (stand-in for RoBERTa hidden)
    D = 32                 # biaff_linear_dim
    L = 2                  # qg_tag_size
    NE = 15                # ne_label_size
    VOCAB = 100

    key = jax.random.PRNGKey(0)
    ks = jax.random.split(key, 9)
    params = {
        "emb": jax.random.normal(ks[0], (VOCAB, H), jnp.float32) * 0.5,
        "w_head": jax.random.normal(ks[1], (H, D), jnp.float32) / jnp.sqrt(H),
        "b_head": jax.random.normal(ks[2], (D,), jnp.float32) * 0.02,
        "w_tail": jax.random.normal(ks[3], (H, D), jnp.float32) / jnp.sqrt(H),
        "b_tail": jax.random.normal(ks[4], (D,), jnp.float32) * 0.02,
        "biaff_U": jax.random.normal(ks[5], (L, D + 1, D + 1), jnp.float32),   # torch.randn
        "w_ne": jax.random.normal(ks[6], (H, NE), jnp.float32) / jnp.sqrt(H),
        "b_ne": jax.random.normal(ks[7], (NE,), jnp.float32) * 0.02,
    }

    enc_input_ids = jax.random.randint(ks[8], (B, S), 0, VOCAB)
    # Encoder stub (see TODO above): deterministic embedding lookup -> (B, S, H).
    enc_output = params["emb"][enc_input_ids]

    sm_scores, ne_logits = table_filling_forward(enc_output, params, qg_tag_size=L)
    sm_scores = jax.block_until_ready(sm_scores)
    ne_logits = jax.block_until_ready(ne_logits)

    sm_ref_bxyl, ne_ref = reference_forward(enc_output, params)
    sm_ref_blss = jnp.transpose(sm_ref_bxyl, (0, 3, 1, 2))   # 'bxyl' -> kernel's (B, L, S, S)

    assert sm_scores.shape == (B, L, S, S) and ne_logits.shape == (B, S, NE)
    # bf16 MXU operands + bf16 output + approx reciprocal => slightly relaxed tolerance.
    assert jnp.allclose(sm_scores.astype(jnp.float32), sm_ref_blss, atol=2e-2, rtol=2e-2)
    assert jnp.allclose(ne_logits, ne_ref, atol=1e-2, rtol=1e-2)

    print("KERNEL_OK")
</pallas_src>

<mosaic_0001>
module attributes {stable_mosaic.version = 11 : i64} {
  func.func @table_filling_kernel(%arg0: i32, %arg1: i32, %arg2: memref<1x8x32xbf16, #tpu.memory_space<vmem>>, %arg3: memref<1x8x32xbf16, #tpu.memory_space<vmem>>, %arg4: memref<32x32xbf16, #tpu.memory_space<vmem>>, %arg5: memref<1x32xf32, #tpu.memory_space<vmem>>, %arg6: memref<32x32xbf16, #tpu.memory_space<vmem>>, %arg7: memref<1x32xf32, #tpu.memory_space<vmem>>, %arg8: memref<32x64xbf16, #tpu.memory_space<vmem>>, %arg9: memref<32x2xbf16, #tpu.memory_space<vmem>>, %arg10: memref<2x32xbf16, #tpu.memory_space<vmem>>, %arg11: memref<2x1xf32, #tpu.memory_space<vmem>>, %arg12: memref<32x128xbf16, #tpu.memory_space<vmem>>, %arg13: memref<1x128xf32, #tpu.memory_space<vmem>>, %arg14: memref<1x2x8x8xbf16, #tpu.memory_space<vmem>>, %arg15: memref<1x8x128xf32, #tpu.memory_space<vmem>>, %arg16: memref<2x8x8xf32, #tpu.memory_space<vmem>>) attributes {dimension_semantics = [#tpu.dimension_semantics<parallel>, #tpu.dimension_semantics<parallel>], iteration_bounds = array<i64: 2, 1>, scalar_prefetch = 0 : i64, scratch_operands = 1 : i64, tpu.core_type = #tpu.core_type<tc>, window_params = [{transform_indices = @transform_0, window_bounds = array<i64: 1, 8, 32>}, {transform_indices = @transform_1, window_bounds = array<i64: 1, 8, 32>}, {pipeline_mode = #tpu.pipeline_mode<synchronous>, transform_indices = @transform_2, window_bounds = array<i64: 32, 32>}, {pipeline_mode = #tpu.pipeline_mode<synchronous>, transform_indices = @transform_3, window_bounds = array<i64: 1, 32>}, {pipeline_mode = #tpu.pipeline_mode<synchronous>, transform_indices = @transform_4, window_bounds = array<i64: 32, 32>}, {pipeline_mode = #tpu.pipeline_mode<synchronous>, transform_indices = @transform_5, window_bounds = array<i64: 1, 32>}, {pipeline_mode = #tpu.pipeline_mode<synchronous>, transform_indices = @transform_6, window_bounds = array<i64: 32, 64>}, {pipeline_mode = #tpu.pipeline_mode<synchronous>, transform_indices = @transform_7, window_bounds = array<i64: 32, 2>}, {pipeline_mode = #tpu.pipeline_mode<synchronous>, transform_indices = @transform_8, window_bounds = array<i64: 2, 32>}, {pipeline_mode = #tpu.pipeline_mode<synchronous>, transform_indices = @transform_9, window_bounds = array<i64: 2, 1>}, {pipeline_mode = #tpu.pipeline_mode<synchronous>, transform_indices = @transform_10, window_bounds = array<i64: 32, 128>}, {pipeline_mode = #tpu.pipeline_mode<synchronous>, transform_indices = @transform_11, window_bounds = array<i64: 1, 128>}, {transform_indices = @transform_12, window_bounds = array<i64: 1, 2, 8, 8>}, {transform_indices = @transform_13, window_bounds = array<i64: 1, 8, 128>}]} {
    %c0 = arith.constant 0 : index
    %c0_0 = arith.constant 0 : index
    %c0_1 = arith.constant 0 : index
    %0 = vector.load %arg2[%c0, %c0_0, %c0_1] : memref<1x8x32xbf16, #tpu.memory_space<vmem>>, vector<1x8x32xbf16>
    %1 = vector.shape_cast %0 : vector<1x8x32xbf16> to vector<8x32xbf16>
    %c0_2 = arith.constant 0 : index
    %c0_3 = arith.constant 0 : index
    %c0_4 = arith.constant 0 : index
    %2 = vector.load %arg3[%c0_2, %c0_3, %c0_4] : memref<1x8x32xbf16, #tpu.memory_space<vmem>>, vector<1x8x32xbf16>
    %3 = vector.shape_cast %2 : vector<1x8x32xbf16> to vector<8x32xbf16>
    %c0_5 = arith.constant 0 : index
    %c0_6 = arith.constant 0 : index
    %4 = vector.load %arg12[%c0_5, %c0_6] : memref<32x128xbf16, #tpu.memory_space<vmem>>, vector<32x128xbf16>
    %cst = arith.constant dense<0.000000e+00> : vector<8x128xf32>
    %5 = tpu.matmul %1, %4, %cst {dimension_numbers = #tpu.dot_dimension_numbers<[1], [0], [0], [1], [0, 0, 1, 1], [], []>} : vector<8x32xbf16>, vector<32x128xbf16>, vector<8x128xf32> -> vector<8x128xf32>
    %c0_7 = arith.constant 0 : index
    %c0_8 = arith.constant 0 : index
    %6 = vector.load %arg13[%c0_7, %c0_8] : memref<1x128xf32, #tpu.memory_space<vmem>>, vector<1x128xf32>
    %7 = vector.broadcast %6 : vector<1x128xf32> to vector<8x128xf32>
    %8 = arith.addf %5, %7 : vector<8x128xf32>
    %c0_9 = arith.constant 0 : index
    %c0_10 = arith.constant 0 : index
    %c0_11 = arith.constant 0 : index
    %9 = vector.load %arg15[%c0_9, %c0_10, %c0_11] : memref<1x8x128xf32, #tpu.memory_space<vmem>>, vector<1x8x128xf32>
    %10 = vector.shape_cast %9 : vector<1x8x128xf32> to vector<8x128xf32>
    %11 = vector.shape_cast %8 : vector<8x128xf32> to vector<1x8x128xf32>
    tpu.vector_store %arg15[%c0_9, %c0_10, %c0_11], %11 {strides = array<i32>} : memref<1x8x128xf32, #tpu.memory_space<vmem>>, vector<1x8x128xf32>,
    %c0_12 = arith.constant 0 : index
    %c0_13 = arith.constant 0 : index
    %12 = vector.load %arg4[%c0_12, %c0_13] : memref<32x32xbf16, #tpu.memory_space<vmem>>, vector<32x32xbf16>
    %cst_14 = arith.constant dense<0.000000e+00> : vector<8x32xf32>
    %13 = tpu.matmul %1, %12, %cst_14 {dimension_numbers = #tpu.dot_dimension_numbers<[1], [0], [0], [1], [0, 0, 1, 1], [], []>} : vector<8x32xbf16>, vector<32x32xbf16>, vector<8x32xf32> -> vector<8x32xf32>
    %c0_15 = arith.constant 0 : index
    %c0_16 = arith.constant 0 : index
    %14 = vector.load %arg5[%c0_15, %c0_16] : memref<1x32xf32, #tpu.memory_space<vmem>>, vector<1x32xf32>
    %15 = vector.broadcast %14 : vector<1x32xf32> to vector<8x32xf32>
    %16 = arith.addf %13, %15 : vector<8x32xf32>
    %cst_17 = arith.constant 5.000000e-01 : f32
    %17 = vector.broadcast %cst_17 : f32 to vector<8x32xf32>
    %18 = arith.mulf %17, %16 : vector<8x32xf32>
    %cst_18 = arith.constant 0.707106769 : f32
    %19 = vector.broadcast %cst_18 : f32 to vector<8x32xf32>
    %20 = arith.mulf %16, %19 : vector<8x32xf32>
    %cst_19 = arith.constant 0.000000e+00 : f32
    %21 = vector.broadcast %cst_19 : f32 to vector<8x32xf32>
    %22 = arith.cmpf oge, %20, %21 : vector<8x32xf32>
    %cst_20 = arith.constant 1.000000e+00 : f32
    %cst_21 = arith.constant -1.000000e+00 : f32
    %23 = vector.broadcast %cst_20 : f32 to vector<8x32xf32>
    %24 = vector.broadcast %cst_21 : f32 to vector<8x32xf32>
    %25 = arith.select %22, %23, %24 : vector<8x32xi1>, vector<8x32xf32>
    %26 = math.absf %20 : vector<8x32xf32>
    %cst_22 = arith.constant 0.327591091 : f32
    %27 = vector.broadcast %cst_22 : f32 to vector<8x32xf32>
    %28 = arith.mulf %27, %26 : vector<8x32xf32>
    %cst_23 = arith.constant 1.000000e+00 : f32
    %29 = vector.broadcast %cst_23 : f32 to vector<8x32xf32>
    %30 = arith.addf %29, %28 : vector<8x32xf32>
    %cst_24 = arith.constant 1.000000e+00 : f32
    %31 = vector.broadcast %cst_24 : f32 to vector<8x32xf32>
    %32 = arith.divf %31, %30 : vector<8x32xf32>
    %cst_25 = arith.constant 1.06140542 : f32
    %33 = vector.broadcast %cst_25 : f32 to vector<8x32xf32>
    %34 = arith.mulf %33, %32 : vector<8x32xf32>
    %cst_26 = arith.constant -1.45315206 : f32
    %35 = vector.broadcast %cst_26 : f32 to vector<8x32xf32>
    %36 = arith.addf %34, %35 : vector<8x32xf32>
    %37 = arith.mulf %36, %32 : vector<8x32xf32>
    %cst_27 = arith.constant 1.42141378 : f32
    %38 = vector.broadcast %cst_27 : f32 to vector<8x32xf32>
    %39 = arith.addf %37, %38 : vector<8x32xf32>
    %40 = arith.mulf %39, %32 : vector<8x32xf32>
    %cst_28 = arith.constant -0.284496725 : f32
    %41 = vector.broadcast %cst_28 : f32 to vector<8x32xf32>
    %42 = arith.addf %40, %41 : vector<8x32xf32>
    %43 = arith.mulf %42, %32 : vector<8x32xf32>
    %cst_29 = arith.constant 0.254829586 : f32
    %44 = vector.broadcast %cst_29 : f32 to vector<8x32xf32>
    %45 = arith.addf %43, %44 : vector<8x32xf32>
    %46 = arith.mulf %45, %32 : vector<8x32xf32>
    %cst_30 = arith.constant 0.000000e+00 : f32
    %47 = vector.broadcast %cst_30 : f32 to vector<8x32xf32>
    %48 = arith.subf %47, %26 : vector<8x32xf32>
    %49 = arith.mulf %48, %26 : vector<8x32xf32>
    %50 = math.exp %49 : vector<8x32xf32>
    %51 = arith.mulf %46, %50 : vector<8x32xf32>
    %cst_31 = arith.constant 1.000000e+00 : f32
    %52 = vector.broadcast %cst_31 : f32 to vector<8x32xf32>
    %53 = arith.subf %52, %51 : vector<8x32xf32>
    %54 = arith.mulf %25, %53 : vector<8x32xf32>
    %cst_32 = arith.constant 1.000000e+00 : f32
    %55 = vector.broadcast %cst_32 : f32 to vector<8x32xf32>
    %56 = arith.addf %55, %54 : vector<8x32xf32>
    %57 = arith.mulf %18, %56 : vector<8x32xf32>
    %c0_33 = arith.constant 0 : index
    %c0_34 = arith.constant 0 : index
    %58 = vector.load %arg6[%c0_33, %c0_34] : memref<32x32xbf16, #tpu.memory_space<vmem>>, vector<32x32xbf16>
    %cst_35 = arith.constant dense<0.000000e+00> : vector<8x32xf32>
    %59 = tpu.matmul %3, %58, %cst_35 {dimension_numbers = #tpu.dot_dimension_numbers<[1], [0], [0], [1], [0, 0, 1, 1], [], []>} : vector<8x32xbf16>, vector<32x32xbf16>, vector<8x32xf32> -> vector<8x32xf32>
    %c0_36 = arith.constant 0 : index
    %c0_37 = arith.constant 0 : index
    %60 = vector.load %arg7[%c0_36, %c0_37] : memref<1x32xf32, #tpu.memory_space<vmem>>, vector<1x32xf32>
    %61 = vector.broadcast %60 : vector<1x32xf32> to vector<8x32xf32>
    %62 = arith.addf %59, %61 : vector<8x32xf32>
    %cst_38 = arith.constant 5.000000e-01 : f32
    %63 = vector.broadcast %cst_38 : f32 to vector<8x32xf32>
    %64 = arith.mulf %63, %62 : vector<8x32xf32>
    %cst_39 = arith.constant 0.707106769 : f32
    %65 = vector.broadcast %cst_39 : f32 to vector<8x32xf32>
    %66 = arith.mulf %62, %65 : vector<8x32xf32>
    %cst_40 = arith.constant 0.000000e+00 : f32
    %67 = vector.broadcast %cst_40 : f32 to vector<8x32xf32>
    %68 = arith.cmpf oge, %66, %67 : vector<8x32xf32>
    %cst_41 = arith.constant 1.000000e+00 : f32
    %cst_42 = arith.constant -1.000000e+00 : f32
    %69 = vector.broadcast %cst_41 : f32 to vector<8x32xf32>
    %70 = vector.broadcast %cst_42 : f32 to vector<8x32xf32>
    %71 = arith.select %68, %69, %70 : vector<8x32xi1>, vector<8x32xf32>
    %72 = math.absf %66 : vector<8x32xf32>
    %cst_43 = arith.constant 0.327591091 : f32
    %73 = vector.broadcast %cst_43 : f32 to vector<8x32xf32>
    %74 = arith.mulf %73, %72 : vector<8x32xf32>
    %cst_44 = arith.constant 1.000000e+00 : f32
    %75 = vector.broadcast %cst_44 : f32 to vector<8x32xf32>
    %76 = arith.addf %75, %74 : vector<8x32xf32>
    %cst_45 = arith.constant 1.000000e+00 : f32
    %77 = vector.broadcast %cst_45 : f32 to vector<8x32xf32>
    %78 = arith.divf %77, %76 : vector<8x32xf32>
    %cst_46 = arith.constant 1.06140542 : f32
    %79 = vector.broadcast %cst_46 : f32 to vector<8x32xf32>
    %80 = arith.mulf %79, %78 : vector<8x32xf32>
    %cst_47 = arith.constant -1.45315206 : f32
    %81 = vector.broadcast %cst_47 : f32 to vector<8x32xf32>
    %82 = arith.addf %80, %81 : vector<8x32xf32>
    %83 = arith.mulf %82, %78 : vector<8x32xf32>
    %cst_48 = arith.constant 1.42141378 : f32
    %84 = vector.broadcast %cst_48 : f32 to vector<8x32xf32>
    %85 = arith.addf %83, %84 : vector<8x32xf32>
    %86 = arith.mulf %85, %78 : vector<8x32xf32>
    %cst_49 = arith.constant -0.284496725 : f32
    %87 = vector.broadcast %cst_49 : f32 to vector<8x32xf32>
    %88 = arith.addf %86, %87 : vector<8x32xf32>
    %89 = arith.mulf %88, %78 : vector<8x32xf32>
    %cst_50 = arith.constant 0.254829586 : f32
    %90 = vector.broadcast %cst_50 : f32 to vector<8x32xf32>
    %91 = arith.addf %89, %90 : vector<8x32xf32>
    %92 = arith.mulf %91, %78 : vector<8x32xf32>
    %cst_51 = arith.constant 0.000000e+00 : f32
    %93 = vector.broadcast %cst_51 : f32 to vector<8x32xf32>
    %94 = arith.subf %93, %72 : vector<8x32xf32>
    %95 = arith.mulf %94, %72 : vector<8x32xf32>
    %96 = math.exp %95 : vector<8x32xf32>
    %97 = arith.mulf %92, %96 : vector<8x32xf32>
    %cst_52 = arith.constant 1.000000e+00 : f32
    %98 = vector.broadcast %cst_52 : f32 to vector<8x32xf32>
    %99 = arith.subf %98, %97 : vector<8x32xf32>
    %100 = arith.mulf %71, %99 : vector<8x32xf32>
    %cst_53 = arith.constant 1.000000e+00 : f32
    %101 = vector.broadcast %cst_53 : f32 to vector<8x32xf32>
    %102 = arith.addf %101, %100 : vector<8x32xf32>
    %103 = arith.mulf %64, %102 : vector<8x32xf32>
    %104 = arith.truncf %57 : vector<8x32xf32> to vector<8x32xbf16>
    %105 = tpu.transpose %103, [1, 0] : vector<8x32xf32> -> vector<32x8xf32>
    %106 = arith.truncf %105 : vector<32x8xf32> to vector<32x8xbf16>
    %c0_54 = arith.constant 0 : index
    %c0_55 = arith.constant 0 : index
    %107 = vector.load %arg8[%c0_54, %c0_55] : memref<32x64xbf16, #tpu.memory_space<vmem>>, vector<32x64xbf16>
    %cst_56 = arith.constant dense<0.000000e+00> : vector<8x64xf32>
    %108 = tpu.matmul %104, %107, %cst_56 {dimension_numbers = #tpu.dot_dimension_numbers<[1], [0], [0], [1], [0, 0, 1, 1], [], []>} : vector<8x32xbf16>, vector<32x64xbf16>, vector<8x64xf32> -> vector<8x64xf32>
    %c0_57 = arith.constant 0 : index
    %c0_58 = arith.constant 0 : index
    %109 = vector.load %arg9[%c0_57, %c0_58] : memref<32x2xbf16, #tpu.memory_space<vmem>>, vector<32x2xbf16>
    %cst_59 = arith.constant dense<0.000000e+00> : vector<8x2xf32>
    %110 = tpu.matmul %104, %109, %cst_59 {dimension_numbers = #tpu.dot_dimension_numbers<[1], [0], [0], [1], [0, 0, 1, 1], [], []>} : vector<8x32xbf16>, vector<32x2xbf16>, vector<8x2xf32> -> vector<8x2xf32>
    %c0_60 = arith.constant 0 : index
    %c0_61 = arith.constant 0 : index
    %111 = vector.load %arg10[%c0_60, %c0_61] : memref<2x32xbf16, #tpu.memory_space<vmem>>, vector<2x32xbf16>
    %cst_62 = arith.constant dense<0.000000e+00> : vector<2x8xf32>
    %112 = tpu.matmul %111, %106, %cst_62 {dimension_numbers = #tpu.dot_dimension_numbers<[1], [0], [0], [1], [0, 0, 1, 1], [], []>} : vector<2x32xbf16>, vector<32x8xbf16>, vector<2x8xf32> -> vector<2x8xf32>
    %c0_63 = arith.constant 0 : index
    %c0_64 = arith.constant 0 : index
    %113 = vector.load %arg11[%c0_63, %c0_64] : memref<2x1xf32, #tpu.memory_space<vmem>>, vector<2x1xf32>
    %114 = vector.broadcast %113 : vector<2x1xf32> to vector<2x8xf32>
    %115 = arith.addf %112, %114 : vector<2x8xf32>
    %116 = vector.extract_strided_slice %108 {offsets = [0, 0], sizes = [8, 32], strides = [1, 1]} : vector<8x64xf32> to vector<8x32xf32>
    %117 = arith.truncf %116 : vector<8x32xf32> to vector<8x32xbf16>
    %cst_65 = arith.constant dense<0.000000e+00> : vector<8x8xf32>
    %118 = tpu.matmul %117, %106, %cst_65 {dimension_numbers = #tpu.dot_dimension_numbers<[1], [0], [0], [1], [0, 0, 1, 1], [], []>} : vector<8x32xbf16>, vector<32x8xbf16>, vector<8x8xf32> -> vector<8x8xf32>
    %119 = vector.extract_strided_slice %110 {offsets = [0, 0], sizes = [8, 1], strides = [1, 1]} : vector<8x2xf32> to vector<8x1xf32>
    %120 = vector.broadcast %119 : vector<8x1xf32> to vector<8x8xf32>
    %121 = arith.addf %118, %120 : vector<8x8xf32>
    %122 = vector.extract_strided_slice %115 {offsets = [0, 0], sizes = [1, 8], strides = [1, 1]} : vector<2x8xf32> to vector<1x8xf32>
    %123 = vector.broadcast %122 : vector<1x8xf32> to vector<8x8xf32>
    %124 = arith.addf %121, %123 : vector<8x8xf32>
    %c0_66 = arith.constant 0 : index
    %c0_67 = arith.constant 0 : index
    %c0_68 = arith.constant 0 : index
    %125 = vector.load %arg16[%c0_66, %c0_67, %c0_68] : memref<2x8x8xf32, #tpu.memory_space<vmem>>, vector<1x8x8xf32>
    %126 = vector.shape_cast %125 : vector<1x8x8xf32> to vector<8x8xf32>
    %127 = vector.shape_cast %124 : vector<8x8xf32> to vector<1x8x8xf32>
    tpu.vector_store %arg16[%c0_66, %c0_67, %c0_68], %127 {strides = array<i32>} : memref<2x8x8xf32, #tpu.memory_space<vmem>>, vector<1x8x8xf32>,
    %128 = vector.extract_strided_slice %108 {offsets = [0, 32], sizes = [8, 32], strides = [1, 1]} : vector<8x64xf32> to vector<8x32xf32>
    %129 = arith.truncf %128 : vector<8x32xf32> to vector<8x32xbf16>
    %cst_69 = arith.constant dense<0.000000e+00> : vector<8x8xf32>
    %130 = tpu.matmul %129, %106, %cst_69 {dimension_numbers = #tpu.dot_dimension_numbers<[1], [0], [0], [1], [0, 0, 1, 1], [], []>} : vector<8x32xbf16>, vector<32x8xbf16>, vector<8x8xf32> -> vector<8x8xf32>
    %131 = vector.extract_strided_slice %110 {offsets = [0, 1], sizes = [8, 1], strides = [1, 1]} : vector<8x2xf32> to vector<8x1xf32>
    %132 = vector.broadcast %131 : vector<8x1xf32> to vector<8x8xf32>
    %133 = arith.addf %130, %132 : vector<8x8xf32>
    %134 = vector.extract_strided_slice %115 {offsets = [1, 0], sizes = [1, 8], strides = [1, 1]} : vector<2x8xf32> to vector<1x8xf32>
    %135 = vector.broadcast %134 : vector<1x8xf32> to vector<8x8xf32>
    %136 = arith.addf %133, %135 : vector<8x8xf32>
    %c1 = arith.constant 1 : index
    %c0_70 = arith.constant 0 : index
    %c0_71 = arith.constant 0 : index
    %137 = vector.load %arg16[%c1, %c0_70, %c0_71] : memref<2x8x8xf32, #tpu.memory_space<vmem>>, vector<1x8x8xf32>
    %138 = vector.shape_cast %137 : vector<1x8x8xf32> to vector<8x8xf32>
    %139 = vector.shape_cast %136 : vector<8x8xf32> to vector<1x8x8xf32>
    tpu.vector_store %arg16[%c1, %c0_70, %c0_71], %139 {strides = array<i32>} : memref<2x8x8xf32, #tpu.memory_space<vmem>>, vector<1x8x8xf32>,
    %c0_72 = arith.constant 0 : index
    %c0_73 = arith.constant 0 : index
    %c0_74 = arith.constant 0 : index
    %140 = vector.load %arg16[%c0_72, %c0_73, %c0_74] : memref<2x8x8xf32, #tpu.memory_space<vmem>>, vector<1x8x8xf32>
    %141 = vector.shape_cast %140 : vector<1x8x8xf32> to vector<8x8xf32>
    %c1_75 = arith.constant 1 : index
    %c0_76 = arith.constant 0 : index
    %c0_77 = arith.constant 0 : index
    %142 = vector.load %arg16[%c1_75, %c0_76, %c0_77] : memref<2x8x8xf32, #tpu.memory_space<vmem>>, vector<1x8x8xf32>
    %143 = vector.shape_cast %142 : vector<1x8x8xf32> to vector<8x8xf32>
    %144 = arith.maximumf %141, %143 : vector<8x8xf32>
    %cst_78 = arith.constant 0.000000e+00 : f32
    %145 = vector.broadcast %cst_78 : f32 to vector<8x8xf32>
    %c0_79 = arith.constant 0 : index
    %c0_80 = arith.constant 0 : index
    %c0_81 = arith.constant 0 : index
    %146 = vector.load %arg16[%c0_79, %c0_80, %c0_81] : memref<2x8x8xf32, #tpu.memory_space<vmem>>, vector<1x8x8xf32>
    %147 = vector.shape_cast %146 : vector<1x8x8xf32> to vector<8x8xf32>
    %148 = arith.subf %147, %144 : vector<8x8xf32>
    %149 = math.exp %148 : vector<8x8xf32>
    %c0_82 = arith.constant 0 : index
    %c0_83 = arith.constant 0 : index
    %c0_84 = arith.constant 0 : index
    %150 = vector.load %arg16[%c0_82, %c0_83, %c0_84] : memref<2x8x8xf32, #tpu.memory_space<vmem>>, vector<1x8x8xf32>
    %151 = vector.shape_cast %150 : vector<1x8x8xf32> to vector<8x8xf32>
    %152 = vector.shape_cast %149 : vector<8x8xf32> to vector<1x8x8xf32>
    tpu.vector_store %arg16[%c0_82, %c0_83, %c0_84], %152 {strides = array<i32>} : memref<2x8x8xf32, #tpu.memory_space<vmem>>, vector<1x8x8xf32>,
    %153 = arith.addf %145, %149 : vector<8x8xf32>
    %c1_85 = arith.constant 1 : index
    %c0_86 = arith.constant 0 : index
    %c0_87 = arith.constant 0 : index
    %154 = vector.load %arg16[%c1_85, %c0_86, %c0_87] : memref<2x8x8xf32, #tpu.memory_space<vmem>>, vector<1x8x8xf32>
    %155 = vector.shape_cast %154 : vector<1x8x8xf32> to vector<8x8xf32>
    %156 = arith.subf %155, %144 : vector<8x8xf32>
    %157 = math.exp %156 : vector<8x8xf32>
    %c1_88 = arith.constant 1 : index
    %c0_89 = arith.constant 0 : index
    %c0_90 = arith.constant 0 : index
    %158 = vector.load %arg16[%c1_88, %c0_89, %c0_90] : memref<2x8x8xf32, #tpu.memory_space<vmem>>, vector<1x8x8xf32>
    %159 = vector.shape_cast %158 : vector<1x8x8xf32> to vector<8x8xf32>
    %160 = vector.shape_cast %157 : vector<8x8xf32> to vector<1x8x8xf32>
    tpu.vector_store %arg16[%c1_88, %c0_89, %c0_90], %160 {strides = array<i32>} : memref<2x8x8xf32, #tpu.memory_space<vmem>>, vector<1x8x8xf32>,
    %161 = arith.addf %153, %157 : vector<8x8xf32>
    %162 = tpu.reciprocal %161 {approx = true} : vector<8x8xf32> -> vector<8x8xf32>
    %c0_91 = arith.constant 0 : index
    %c0_92 = arith.constant 0 : index
    %c0_93 = arith.constant 0 : index
    %163 = vector.load %arg16[%c0_91, %c0_92, %c0_93] : memref<2x8x8xf32, #tpu.memory_space<vmem>>, vector<1x8x8xf32>
    %164 = vector.shape_cast %163 : vector<1x8x8xf32> to vector<8x8xf32>
    %165 = arith.mulf %164, %162 : vector<8x8xf32>
    %166 = arith.truncf %165 : vector<8x8xf32> to vector<8x8xbf16>
    %c0_94 = arith.constant 0 : index
    %c0_95 = arith.constant 0 : index
    %c0_96 = arith.constant 0 : index
    %c0_97 = arith.constant 0 : index
    %167 = vector.load %arg14[%c0_94, %c0_95, %c0_96, %c0_97] : memref<1x2x8x8xbf16, #tpu.memory_space<vmem>>, vector<1x1x8x8xbf16>
    %168 = vector.shape_cast %167 : vector<1x1x8x8xbf16> to vector<8x8xbf16>
    %169 = vector.shape_cast %166 : vector<8x8xbf16> to vector<1x1x8x8xbf16>
    tpu.vector_store %arg14[%c0_94, %c0_95, %c0_96, %c0_97], %169 {strides = array<i32>} : memref<1x2x8x8xbf16, #tpu.memory_space<vmem>>, vector<1x1x8x8xbf16>,
    %c1_98 = arith.constant 1 : index
    %c0_99 = arith.constant 0 : index
    %c0_100 = arith.constant 0 : index
    %170 = vector.load %arg16[%c1_98, %c0_99, %c0_100] : memref<2x8x8xf32, #tpu.memory_space<vmem>>, vector<1x8x8xf32>
    %171 = vector.shape_cast %170 : vector<1x8x8xf32> to vector<8x8xf32>
    %172 = arith.mulf %171, %162 : vector<8x8xf32>
    %173 = arith.truncf %172 : vector<8x8xf32> to vector<8x8xbf16>
    %c0_101 = arith.constant 0 : index
    %c1_102 = arith.constant 1 : index
    %c0_103 = arith.constant 0 : index
    %c0_104 = arith.constant 0 : index
    %174 = vector.load %arg14[%c0_101, %c1_102, %c0_103, %c0_104] : memref<1x2x8x8xbf16, #tpu.memory_space<vmem>>, vector<1x1x8x8xbf16>
    %175 = vector.shape_cast %174 : vector<1x1x8x8xbf16> to vector<8x8xbf16>
    %176 = vector.shape_cast %173 : vector<8x8xbf16> to vector<1x1x8x8xbf16>
    tpu.vector_store %arg14[%c0_101, %c1_102, %c0_103, %c0_104], %176 {strides = array<i32>} : memref<1x2x8x8xbf16, #tpu.memory_space<vmem>>, vector<1x1x8x8xbf16>,
    return
  }
  func.func @transform_0(%arg0: i32, %arg1: i32) -> (i32, i32, i32) {
    %c0_i32 = arith.constant 0 : i32
    %c0_i32_0 = arith.constant 0 : i32
    return %arg0, %arg1, %c0_i32 : i32, i32, i32
  }
  func.func @transform_1(%arg0: i32, %arg1: i32) -> (i32, i32, i32) {
    %c0_i32 = arith.constant 0 : i32
    %c0_i32_0 = arith.constant 0 : i32
    %c0_i32_1 = arith.constant 0 : i32
    return %arg0, %c0_i32, %c0_i32_0 : i32, i32, i32
  }
  func.func @transform_2(%arg0: i32, %arg1: i32) -> (i32, i32) {
    %c0_i32 = arith.constant 0 : i32
    %c0_i32_0 = arith.constant 0 : i32
    %c0_i32_1 = arith.constant 0 : i32
    return %c0_i32, %c0_i32_0 : i32, i32
  }
  func.func @transform_3(%arg0: i32, %arg1: i32) -> (i32, i32) {
    %c0_i32 = arith.constant 0 : i32
    %c0_i32_0 = arith.constant 0 : i32
    %c0_i32_1 = arith.constant 0 : i32
    return %c0_i32, %c0_i32_0 : i32, i32
  }
  func.func @transform_4(%arg0: i32, %arg1: i32) -> (i32, i32) {
    %c0_i32 = arith.constant 0 : i32
    %c0_i32_0 = arith.constant 0 : i32
    %c0_i32_1 = arith.constant 0 : i32
    return %c0_i32, %c0_i32_0 : i32, i32
  }
  func.func @transform_5(%arg0: i32, %arg1: i32) -> (i32, i32) {
    %c0_i32 = arith.constant 0 : i32
    %c0_i32_0 = arith.constant 0 : i32
    %c0_i32_1 = arith.constant 0 : i32
    return %c0_i32, %c0_i32_0 : i32, i32
  }
  func.func @transform_6(%arg0: i32, %arg1: i32) -> (i32, i32) {
    %c0_i32 = arith.constant 0 : i32
    %c0_i32_0 = arith.constant 0 : i32
    %c0_i32_1 = arith.constant 0 : i32
    return %c0_i32, %c0_i32_0 : i32, i32
  }
  func.func @transform_7(%arg0: i32, %arg1: i32) -> (i32, i32) {
    %c0_i32 = arith.constant 0 : i32
    %c0_i32_0 = arith.constant 0 : i32
    %c0_i32_1 = arith.constant 0 : i32
    return %c0_i32, %c0_i32_0 : i32, i32
  }
  func.func @transform_8(%arg0: i32, %arg1: i32) -> (i32, i32) {
    %c0_i32 = arith.constant 0 : i32
    %c0_i32_0 = arith.constant 0 : i32
    %c0_i32_1 = arith.constant 0 : i32
    return %c0_i32, %c0_i32_0 : i32, i32
  }
  func.func @transform_9(%arg0: i32, %arg1: i32) -> (i32, i32) {
    %c0_i32 = arith.constant 0 : i32
    %c0_i32_0 = arith.constant 0 : i32
    %c0_i32_1 = arith.constant 0 : i32
    return %c0_i32, %c0_i32_0 : i32, i32
  }
  func.func @transform_10(%arg0: i32, %arg1: i32) -> (i32, i32) {
    %c0_i32 = arith.constant 0 : i32
    %c0_i32_0 = arith.constant 0 : i32
    %c0_i32_1 = arith.constant 0 : i32
    return %c0_i32, %c0_i32_0 : i32, i32
  }
  func.func @transform_11(%arg0: i32, %arg1: i32) -> (i32, i32) {
    %c0_i32 = arith.constant 0 : i32
    %c0_i32_0 = arith.constant 0 : i32
    %c0_i32_1 = arith.constant 0 : i32
    return %c0_i32, %c0_i32_0 : i32, i32
  }
  func.func @transform_12(%arg0: i32, %arg1: i32) -> (i32, i32, i32, i32) {
    %c0_i32 = arith.constant 0 : i32
    %c0_i32_0 = arith.constant 0 : i32
    %c0_i32_1 = arith.constant 0 : i32
    return %arg0, %c0_i32, %arg1, %c0_i32_0 : i32, i32, i32, i32
  }
  func.func @transform_13(%arg0: i32, %arg1: i32) -> (i32, i32, i32) {
    %c0_i32 = arith.constant 0 : i32
    %c0_i32_0 = arith.constant 0 : i32
    return %arg0, %arg1, %c0_i32 : i32, i32, i32
  }
}

</mosaic_0001>

<llo_original>
// kernel: tpu_custom_call.1
$region0: #{tpu_custom_call.1}
  #allocation0 [shape = 'u32[]', space=smem, size = 0x4, offset = 0x4, fixed_abs, tag = 'smem constant byte address 0x4 - core index']
  #allocation1 [shape = 'u32[144,128]{1,0:T(1,128)}', space=vmem, size = 0x12000, scoped, tag = 'internal scratch']
  #allocation2 [shape = 'f32[2,8,8]{2,1,0:T(8,128)}', space=vmem, size = 0x2000, scoped, tag = 'scratch operand']
  %s0 = inlined_call_operand.hbm [shape: bf16[2,8,32], index: 0, kind: input, shape index: {}]
  %s1 = inlined_call_operand.hbm [shape: bf16[2,8,32], index: 1, kind: input, shape index: {}]
  %s2 = inlined_call_operand.vmem [shape: bf16[32,32], index: 2, kind: input, shape index: {}]
  %s3 = inlined_call_operand.hbm [shape: f32[1,32], index: 3, kind: input, shape index: {}]
  %s4 = inlined_call_operand.hbm [shape: bf16[32,32], index: 4, kind: input, shape index: {}]
  %s5 = inlined_call_operand.hbm [shape: f32[1,32], index: 5, kind: input, shape index: {}]
  %s6 = inlined_call_operand.hbm [shape: bf16[32,64], index: 6, kind: input, shape index: {}]
  %s7 = inlined_call_operand.vmem [shape: bf16[32,2], index: 7, kind: input, shape index: {}]
  %s8 = inlined_call_operand.vmem [shape: bf16[2,32], index: 8, kind: input, shape index: {}]
  %s9 = inlined_call_operand.vmem [shape: f32[2,1], index: 9, kind: input, shape index: {}]
  %s10 = inlined_call_operand.vmem [shape: bf16[32,128], index: 10, kind: input, shape index: {}]
  %s11 = inlined_call_operand.vmem [shape: f32[1,128], index: 11, kind: input, shape index: {}]
  %s12 = inlined_call_operand.hbm [shape: bf16[2,2,8,8], index: 12, kind: output, shape index: {0}]
  %s13 = inlined_call_operand.hbm [shape: f32[2,8,128], index: 13, kind: output, shape index: {1}]
  %14 = xla_tuple %s12, %s13
  %s15 = sld [smem:[#allocation0]]
  $region113: #{tpu_custom_call.1} parent=0
    _
  %s17 = ssub.s32 1, %s15
  %s18 = scalar_select 0, %s17, %s15
  $region1: #{tpu_custom_call.1} parent=0
    #allocation3 [shape = 'u8[4096]{0}', space=vmem, size = 0x1000, scoped, tag = 'input window, operand 0']
    #allocation4 [shape = 's32[2]{0}', space=sflag, size = 0x8, scoped, tag = 'scoped memory for tpu_custom_call.1']
    #allocation5 [shape = 's32[2]{0}', space=sflag, size = 0x8, scoped, tag = 'scoped memory for tpu_custom_call.1']
    #allocation6 [shape = 'u8[4096]{0}', space=vmem, size = 0x1000, scoped, tag = 'input window, operand 1']
    #allocation7 [shape = 's32[2]{0}', space=sflag, size = 0x8, scoped, tag = 'scoped memory for tpu_custom_call.1']
    #allocation8 [shape = 'u8[512]{0}', space=vmem, size = 0x400, scoped, tag = 'input window, operand 3, single buffered']
    #allocation9 [shape = 'u8[8192]{0}', space=vmem, size = 0x2000, scoped, tag = 'input window, operand 4, single buffered']
    #allocation10 [shape = 's32[1]{0}', space=sflag, size = 0x4, scoped, tag = 'scoped memory for tpu_custom_call.1']
    #allocation11 [shape = 'u8[512]{0}', space=vmem, size = 0x400, scoped, tag = 'input window, operand 5, single buffered']
    #allocation12 [shape = 'u8[8192]{0}', space=vmem, size = 0x2000, scoped, tag = 'input window, operand 6, single buffered']
    #allocation13 [shape = 's32[1]{0}', space=sflag, size = 0x4, scoped, tag = 'scoped memory for tpu_custom_call.1']
    #allocation14 [shape = 'u8[8192]{0}', space=vmem, size = 0x2000, scoped, tag = 'output window, operand 0']
    #allocation15 [shape = 'u8[8192]{0}', space=vmem, size = 0x2000, scoped, tag = 'output window, operand 1']
    #allocation16 [shape = 's32[2]{0}', space=sflag, size = 0x8, scoped, tag = 'scoped memory for tpu_custom_call.1']
    %19 = vsyncpa [#allocation4], 0
    %s20 = scalar_lea.sflag [#allocation4], 1
    %21 = vsyncpa %s20, 0
    %22 = vsyncpa [#allocation7], 0
    %s23 = scalar_lea.sflag [#allocation7], 1
    %24 = vsyncpa %s23, 0
    %25 = vsyncpa [#allocation10], 0
    %26 = vsyncpa [#allocation13], 0
    %27 = vsyncpa [#allocation5], 0
    %s28 = scalar_lea.sflag [#allocation5], 1
    %29 = vsyncpa %s28, 0
    %30 = vsyncpa [#allocation16], 0
    %s31 = scalar_lea.sflag [#allocation16], 1
    %32 = vsyncpa %s31, 0
    loop: start=0, step=1, limit=4
    $region2: #{tpu_custom_call.1} parent=1 // loop_pre_header
      _
    $region3: #{tpu_custom_call.1} parent=1 // loop_header
      %s34 = sphi 0, %s38
      %p35 = scmp.ge.s32.totalorder %s34, 4
      %s41 = sphi 0, %s53
      %s42 = sphi 0, %s49
      %s43 = sphi 0, %s41
      %s44 = sphi 0, %s42
      %s45 = sphi 0, %s43
      %s46 = sphi 0, %s44
      %s58 = sphi 0, %s60
      %s61 = sphi 0, %s58
      %s62 = sphi 0, %s61
      %s78 = sphi 0, %s62
      %s84 = sphi 0, %s86
      %s87 = sphi 0, %s84
      %s88 = sphi 0, %s87
      %s104 = sphi 0, %s88
      %s108 = sphi 0, %s108
      %s110 = sphi 0, %s108
      %s111 = sphi 0, %s110
      %s125 = sphi 0, %s111
      %s129 = sphi 0, %s129
      %s131 = sphi 0, %s129
      %s132 = sphi 0, %s131
      %s146 = sphi 0, %s132
      %s150 = sphi 0, %s150
      %s152 = sphi 0, %s150
      %s153 = sphi 0, %s152
      %s167 = sphi 0, %s153
      %s171 = sphi 0, %s171
      %s173 = sphi 0, %s171
      %s174 = sphi 0, %s173
      %s188 = sphi 0, %s174
      %s192 = sphi 0, %s192
      %s194 = sphi 0, %s192
      %s195 = sphi 0, %s194
      %s209 = sphi 0, %s195
      %s213 = sphi 0, %s213
      %s215 = sphi 0, %s213
      %s216 = sphi 0, %s215
      %s230 = sphi 0, %s216
      %s234 = sphi 0, %s234
      %s236 = sphi 0, %s234
      %s237 = sphi 0, %s236
      %s251 = sphi 0, %s237
      %s255 = sphi 0, %s255
      %s257 = sphi 0, %s255
      %s258 = sphi 0, %s257
      %s272 = sphi 0, %s258
      %s276 = sphi 0, %s276
      %s278 = sphi 0, %s276
      %s279 = sphi 0, %s278
      %s293 = sphi 0, %s279
      %s297 = sphi 0, %s297
      %s299 = sphi 0, %s297
      %s300 = sphi 0, %s299
      %s314 = sphi 0, %s300
      %s322 = sphi 0, %s324
      %s325 = sphi 0, %s322
      %s326 = sphi 0, %s325
      %s342 = sphi 0, %s326
      %s350 = sphi 0, %s352
      %s353 = sphi 0, %s350
      %s354 = sphi 0, %s353
      %s370 = sphi 0, %s354
    $region4: #{tpu_custom_call.1} parent=1 // loop_header_branch
      %37 = sbr.rel (%p35) target = $region8
    $region5: #{tpu_custom_call.1} parent=1 // loop_body
      %s39 = ssub.s32 %s34, 1
      %s40 = ssub.s32 %s34, 2
      %s47 = sadd.s32 1, %s42
      %p48 = scmp.ge.s32.totalorder %s47, 1
      %s49 = scalar_select %p48, 0, %s47
      %s50 = sadd.s32 1, %s41
      %s51 = scalar_select %p48, %s50, %s41
      %p52 = scmp.ge.s32.totalorder %s51, 2
      %s53 = scalar_select %p52, 0, %s51
      %s54 = ssub.s32 %s41, %s53
      %s55 = ssub.s32 %s42, %s49
      %s56 = sor.u32 %s54, %s55
      %p57 = scmp.eq.s32.totalorder %s56, 0
      %s59 = sadd.s32 %s58, 1
      %s60 = scalar_select %p57, %s58, %s59
      %p63 = pneg %p57
      %p64 = scmp.eq.s32.totalorder %s34, 1
      %p65 = por %p63, %p64
      %p66 = scmp.ne.s32.totalorder %s58, %s61
      %p67 = scmp.eq.s32.totalorder %s34, 0
      %p68 = por %p66, %p67
      %p69 = scmp.ne.s32.totalorder %s58, %s61
      %p70 = scmp.eq.s32.totalorder %s39, 1
      %p71 = por %p69, %p70
      %p72 = scmp.ne.s32.totalorder %s61, %s62
      %p73 = scmp.eq.s32.totalorder %s39, 0
      %p74 = por %p72, %p73
      %p75 = scmp.ne.s32.totalorder %s61, %s62
      %p76 = scmp.eq.s32.totalorder %s40, 1
      %p77 = por %p75, %p76
      %p79 = scmp.ne.s32.totalorder %s62, %s78
      %p80 = scmp.eq.s32.totalorder %s40, 0
      %p81 = por %p79, %p80
      %s82 = ssub.s32 %s41, %s53
      %p83 = scmp.eq.s32.totalorder %s82, 0
      %s85 = sadd.s32 %s84, 1
      %s86 = scalar_select %p83, %s84, %s85
      %p89 = pneg %p83
      %p90 = scmp.eq.s32.totalorder %s34, 1
      %p91 = por %p89, %p90
      %p92 = scmp.ne.s32.totalorder %s84, %s87
      %p93 = scmp.eq.s32.totalorder %s34, 0
      %p94 = por %p92, %p93
      %p95 = scmp.ne.s32.totalorder %s84, %s87
      %p96 = scmp.eq.s32.totalorder %s39, 1
      %p97 = por %p95, %p96
      %p98 = scmp.ne.s32.totalorder %s87, %s88
      %p99 = scmp.eq.s32.totalorder %s39, 0
      %p100 = por %p98, %p99
      %p101 = scmp.ne.s32.totalorder %s87, %s88
      %p102 = scmp.eq.s32.totalorder %s40, 1
      %p103 = por %p101, %p102
      %p105 = scmp.ne.s32.totalorder %s88, %s104
      %p106 = scmp.eq.s32.totalorder %s40, 0
      %p107 = por %p105, %p106
      %s109 = sadd.s32 %s108, 1
      %p112 = scmp.eq.s32.totalorder %s34, 1
      %p113 = scmp.ne.s32.totalorder %s108, %s110
      %p114 = scmp.eq.s32.totalorder %s34, 0
      %p115 = por %p113, %p114
      %p116 = scmp.ne.s32.totalorder %s108, %s110
      %p117 = scmp.eq.s32.totalorder %s39, 1
      %p118 = por %p116, %p117
      %p119 = scmp.ne.s32.totalorder %s110, %s111
      %p120 = scmp.eq.s32.totalorder %s39, 0
      %p121 = por %p119, %p120
      %p122 = scmp.ne.s32.totalorder %s110, %s111
      %p123 = scmp.eq.s32.totalorder %s40, 1
      %p124 = por %p122, %p123
      %p126 = scmp.ne.s32.totalorder %s111, %s125
      %p127 = scmp.eq.s32.totalorder %s40, 0
      %p128 = por %p126, %p127
      %s130 = sadd.s32 %s129, 1
      %p133 = scmp.eq.s32.totalorder %s34, 1
      %p134 = scmp.ne.s32.totalorder %s129, %s131
      %p135 = scmp.eq.s32.totalorder %s34, 0
      %p136 = por %p134, %p135
      %p137 = scmp.ne.s32.totalorder %s129, %s131
      %p138 = scmp.eq.s32.totalorder %s39, 1
      %p139 = por %p137, %p138
      %p140 = scmp.ne.s32.totalorder %s131, %s132
      %p141 = scmp.eq.s32.totalorder %s39, 0
      %p142 = por %p140, %p141
      %p143 = scmp.ne.s32.totalorder %s131, %s132
      %p144 = scmp.eq.s32.totalorder %s40, 1
      %p145 = por %p143, %p144
      %p147 = scmp.ne.s32.totalorder %s132, %s146
      %p148 = scmp.eq.s32.totalorder %s40, 0
      %p149 = por %p147, %p148
      %s151 = sadd.s32 %s150, 1
      %p154 = scmp.eq.s32.totalorder %s34, 1
      %p155 = scmp.ne.s32.totalorder %s150, %s152
      %p156 = scmp.eq.s32.totalorder %s34, 0
      %p157 = por %p155, %p156
      %p158 = scmp.ne.s32.totalorder %s150, %s152
      %p159 = scmp.eq.s32.totalorder %s39, 1
      %p160 = por %p158, %p159
      %p161 = scmp.ne.s32.totalorder %s152, %s153
      %p162 = scmp.eq.s32.totalorder %s39, 0
      %p163 = por %p161, %p162
      %p164 = scmp.ne.s32.totalorder %s152, %s153
      %p165 = scmp.eq.s32.totalorder %s40, 1
      %p166 = por %p164, %p165
      %p168 = scmp.ne.s32.totalorder %s153, %s167
      %p169 = scmp.eq.s32.totalorder %s40, 0
      %p170 = por %p168, %p169
      %s172 = sadd.s32 %s171, 1
      %p175 = scmp.eq.s32.totalorder %s34, 1
      %p176 = scmp.ne.s32.totalorder %s171, %s173
      %p177 = scmp.eq.s32.totalorder %s34, 0
      %p178 = por %p176, %p177
      %p179 = scmp.ne.s32.totalorder %s171, %s173
      %p180 = scmp.eq.s32.totalorder %s39, 1
      %p181 = por %p179, %p180
      %p182 = scmp.ne.s32.totalorder %s173, %s174
      %p183 = scmp.eq.s32.totalorder %s39, 0
      %p184 = por %p182, %p183
      %p185 = scmp.ne.s32.totalorder %s173, %s174
      %p186 = scmp.eq.s32.totalorder %s40, 1
      %p187 = por %p185, %p186
      %p189 = scmp.ne.s32.totalorder %s174, %s188
      %p190 = scmp.eq.s32.totalorder %s40, 0
      %p191 = por %p189, %p190
      %s193 = sadd.s32 %s192, 1
      %p196 = scmp.eq.s32.totalorder %s34, 1
      %p197 = scmp.ne.s32.totalorder %s192, %s194
      %p198 = scmp.eq.s32.totalorder %s34, 0
      %p199 = por %p197, %p198
      %p200 = scmp.ne.s32.totalorder %s192, %s194
      %p201 = scmp.eq.s32.totalorder %s39, 1
      %p202 = por %p200, %p201
      %p203 = scmp.ne.s32.totalorder %s194, %s195
      %p204 = scmp.eq.s32.totalorder %s39, 0
      %p205 = por %p203, %p204
      %p206 = scmp.ne.s32.totalorder %s194, %s195
      %p207 = scmp.eq.s32.totalorder %s40, 1
      %p208 = por %p206, %p207
      %p210 = scmp.ne.s32.totalorder %s195, %s209
      %p211 = scmp.eq.s32.totalorder %s40, 0
      %p212 = por %p210, %p211
      %s214 = sadd.s32 %s213, 1
      %p217 = scmp.eq.s32.totalorder %s34, 1
      %p218 = scmp.ne.s32.totalorder %s213, %s215
      %p219 = scmp.eq.s32.totalorder %s34, 0
      %p220 = por %p218, %p219
      %p221 = scmp.ne.s32.totalorder %s213, %s215
      %p222 = scmp.eq.s32.totalorder %s39, 1
      %p223 = por %p221, %p222
      %p224 = scmp.ne.s32.totalorder %s215, %s216
      %p225 = scmp.eq.s32.totalorder %s39, 0
      %p226 = por %p224, %p225
      %p227 = scmp.ne.s32.totalorder %s215, %s216
      %p228 = scmp.eq.s32.totalorder %s40, 1
      %p229 = por %p227, %p228
      %p231 = scmp.ne.s32.totalorder %s216, %s230
      %p232 = scmp.eq.s32.totalorder %s40, 0
      %p233 = por %p231, %p232
      %s235 = sadd.s32 %s234, 1
      %p238 = scmp.eq.s32.totalorder %s34, 1
      %p239 = scmp.ne.s32.totalorder %s234, %s236
      %p240 = scmp.eq.s32.totalorder %s34, 0
      %p241 = por %p239, %p240
      %p242 = scmp.ne.s32.totalorder %s234, %s236
      %p243 = scmp.eq.s32.totalorder %s39, 1
      %p244 = por %p242, %p243
      %p245 = scmp.ne.s32.totalorder %s236, %s237
      %p246 = scmp.eq.s32.totalorder %s39, 0
      %p247 = por %p245, %p246
      %p248 = scmp.ne.s32.totalorder %s236, %s237
      %p249 = scmp.eq.s32.totalorder %s40, 1
      %p250 = por %p248, %p249
      %p252 = scmp.ne.s32.totalorder %s237, %s251
      %p253 = scmp.eq.s32.totalorder %s40, 0
      %p254 = por %p252, %p253
      %s256 = sadd.s32 %s255, 1
      %p259 = scmp.eq.s32.totalorder %s34, 1
      %p260 = scmp.ne.s32.totalorder %s255, %s257
      %p261 = scmp.eq.s32.totalorder %s34, 0
      %p262 = por %p260, %p261
      %p263 = scmp.ne.s32.totalorder %s255, %s257
      %p264 = scmp.eq.s32.totalorder %s39, 1
      %p265 = por %p263, %p264
      %p266 = scmp.ne.s32.totalorder %s257, %s258
      %p267 = scmp.eq.s32.totalorder %s39, 0
      %p268 = por %p266, %p267
      %p269 = scmp.ne.s32.totalorder %s257, %s258
      %p270 = scmp.eq.s32.totalorder %s40, 1
      %p271 = por %p269, %p270
      %p273 = scmp.ne.s32.totalorder %s258, %s272
      %p274 = scmp.eq.s32.totalorder %s40, 0
      %p275 = por %p273, %p274
      %s277 = sadd.s32 %s276, 1
      %p280 = scmp.eq.s32.totalorder %s34, 1
      %p281 = scmp.ne.s32.totalorder %s276, %s278
      %p282 = scmp.eq.s32.totalorder %s34, 0
      %p283 = por %p281, %p282
      %p284 = scmp.ne.s32.totalorder %s276, %s278
      %p285 = scmp.eq.s32.totalorder %s39, 1
      %p286 = por %p284, %p285
      %p287 = scmp.ne.s32.totalorder %s278, %s279
      %p288 = scmp.eq.s32.totalorder %s39, 0
      %p289 = por %p287, %p288
      %p290 = scmp.ne.s32.totalorder %s278, %s279
      %p291 = scmp.eq.s32.totalorder %s40, 1
      %p292 = por %p290, %p291
      %p294 = scmp.ne.s32.totalorder %s279, %s293
      %p295 = scmp.eq.s32.totalorder %s40, 0
      %p296 = por %p294, %p295
      %s298 = sadd.s32 %s297, 1
      %p301 = scmp.eq.s32.totalorder %s34, 1
      %p302 = scmp.ne.s32.totalorder %s297, %s299
      %p303 = scmp.eq.s32.totalorder %s34, 0
      %p304 = por %p302, %p303
      %p305 = scmp.ne.s32.totalorder %s297, %s299
      %p306 = scmp.eq.s32.totalorder %s39, 1
      %p307 = por %p305, %p306
      %p308 = scmp.ne.s32.totalorder %s299, %s300
      %p309 = scmp.eq.s32.totalorder %s39, 0
      %p310 = por %p308, %p309
      %p311 = scmp.ne.s32.totalorder %s299, %s300
      %p312 = scmp.eq.s32.totalorder %s40, 1
      %p313 = por %p311, %p312
      %p315 = scmp.ne.s32.totalorder %s300, %s314
      %p316 = scmp.eq.s32.totalorder %s40, 0
      %p317 = por %p315, %p316
      %s318 = ssub.s32 %s41, %s53
      %s319 = ssub.s32 %s42, %s49
      %s320 = sor.u32 %s318, %s319
      %p321 = scmp.eq.s32.totalorder %s320, 0
      %s323 = sadd.s32 %s322, 1
      %s324 = scalar_select %p321, %s322, %s323
      %p327 = pneg %p321
      %p328 = scmp.eq.s32.totalorder %s34, 1
      %p329 = por %p327, %p328
      %p330 = scmp.ne.s32.totalorder %s322, %s325
      %p331 = scmp.eq.s32.totalorder %s34, 0
      %p332 = por %p330, %p331
      %p333 = scmp.ne.s32.totalorder %s322, %s325
      %p334 = scmp.eq.s32.totalorder %s39, 1
      %p335 = por %p333, %p334
      %p336 = scmp.ne.s32.totalorder %s325, %s326
      %p337 = scmp.eq.s32.totalorder %s39, 0
      %p338 = por %p336, %p337
      %p339 = scmp.ne.s32.totalorder %s325, %s326
      %p340 = scmp.eq.s32.totalorder %s40, 1
      %p341 = por %p339, %p340
      %p343 = scmp.ne.s32.totalorder %s326, %s342
      %p344 = scmp.eq.s32.totalorder %s40, 0
      %p345 = por %p343, %p344
      %s346 = ssub.s32 %s41, %s53
      %s347 = ssub.s32 %s42, %s49
      %s348 = sor.u32 %s346, %s347
      %p349 = scmp.eq.s32.totalorder %s348, 0
      %s351 = sadd.s32 %s350, 1
      %s352 = scalar_select %p349, %s350, %s351
      %p355 = pneg %p349
      %p356 = scmp.eq.s32.totalorder %s34, 1
      %p357 = por %p355, %p356
      %p358 = scmp.ne.s32.totalorder %s350, %s353
      %p359 = scmp.eq.s32.totalorder %s34, 0
      %p360 = por %p358, %p359
      %p361 = scmp.ne.s32.totalorder %s350, %s353
      %p362 = scmp.eq.s32.totalorder %s39, 1
      %p363 = por %p361, %p362
      %p364 = scmp.ne.s32.totalorder %s353, %s354
      %p365 = scmp.eq.s32.totalorder %s39, 0
      %p366 = por %p364, %p365
      %p367 = scmp.ne.s32.totalorder %s353, %s354
      %p368 = scmp.eq.s32.totalorder %s40, 1
      %p369 = por %p367, %p368
      %p371 = scmp.ne.s32.totalorder %s354, %s370
      %p372 = scmp.eq.s32.totalorder %s40, 0
      %p373 = por %p371, %p372
      %p374 = scmp.le.s32.totalorder 1, %s34
      %p375 = scmp.lt.s32.totalorder %s34, 3
      %p376 = pnand %p374, %p375
      %p377 = pneg %p376
      // Predicated region
      $region9: #{tpu_custom_call.1} parent=5 // pred_check
        _
      $region10: #{tpu_custom_call.1} parent=5 // pred_check_branch
        %379 = sbr.rel (%p376) target = $region12
      $region11: #{tpu_custom_call.1} parent=5 // pred_region
        %s380 = ssub.s32 %s34, 1
        // Predicated region
        $region13: #{tpu_custom_call.1} parent=11 // pred_check
          %p381 = pneg %p121
        $region14: #{tpu_custom_call.1} parent=11 // pred_check_branch
          %383 = sbr.rel (%p381) target = $region16
        $region15: #{tpu_custom_call.1} parent=11 // pred_region
          _
        $region16: #{tpu_custom_call.1} parent=11 // pred_fallthru
          _
        // Predicated region
        $region17: #{tpu_custom_call.1} parent=11 // pred_check
          %p384 = pneg %p142
        $region18: #{tpu_custom_call.1} parent=11 // pred_check_branch
          %386 = sbr.rel (%p384) target = $region20
        $region19: #{tpu_custom_call.1} parent=11 // pred_region
          %s388 = ssub.s32 16, 16
          %389 = vsyncadd [#allocation7], %s388
          %s391 = sshll.u32 [#allocation8], 4
          %s392 = int_to_ptr.vmem [resolvable:$true] %s391
          %394 = dma.hbm_to_vmem [thread:$0]  %s3, 16, %s392, [#allocation7]
        $region20: #{tpu_custom_call.1} parent=11 // pred_fallthru
          _
        // Predicated region
        $region21: #{tpu_custom_call.1} parent=11 // pred_check
          %p395 = pneg %p163
        $region22: #{tpu_custom_call.1} parent=11 // pred_check_branch
          %397 = sbr.rel (%p395) target = $region24
        $region23: #{tpu_custom_call.1} parent=11 // pred_region
          %s399 = ssub.s32 256, 256
          %400 = vsyncadd [#allocation10], %s399
          %s401 = sshll.u32 [#allocation9], 4
          %s402 = int_to_ptr.vmem [resolvable:$true] %s401
          %407 = dma.hbm_to_vmem [thread:$0]  %s4, 256, %s402, [#allocation10], 64, 64, 4
        $region24: #{tpu_custom_call.1} parent=11 // pred_fallthru
          _
        // Predicated region
        $region25: #{tpu_custom_call.1} parent=11 // pred_check
          %p408 = pneg %p184
        $region26: #{tpu_custom_call.1} parent=11 // pred_check_branch
          %410 = sbr.rel (%p408) target = $region28
        $region27: #{tpu_custom_call.1} parent=11 // pred_region
          %s412 = ssub.s32 16, 16
          %413 = vsyncadd [#allocation10], %s412
          %s415 = sshll.u32 [#allocation11], 4
          %s416 = int_to_ptr.vmem [resolvable:$true] %s415
          %418 = dma.hbm_to_vmem [thread:$0]  %s5, 16, %s416, [#allocation10]
        $region28: #{tpu_custom_call.1} parent=11 // pred_fallthru
          _
        // Predicated region
        $region29: #{tpu_custom_call.1} parent=11 // pred_check
          %p419 = pneg %p205
        $region30: #{tpu_custom_call.1} parent=11 // pred_check_branch
          %421 = sbr.rel (%p419) target = $region32
        $region31: #{tpu_custom_call.1} parent=11 // pred_region
          %s423 = ssub.s32 256, 256
          %424 = vsyncadd [#allocation13], %s423
          %s425 = sshll.u32 [#allocation12], 4
          %s426 = int_to_ptr.vmem [resolvable:$true] %s425
          %431 = dma.hbm_to_vmem [thread:$0]  %s6, 256, %s426, [#allocation13], 64, 64, 4
        $region32: #{tpu_custom_call.1} parent=11 // pred_fallthru
          _
        // Predicated region
        $region33: #{tpu_custom_call.1} parent=11 // pred_check
          %p432 = pneg %p226
        $region34: #{tpu_custom_call.1} parent=11 // pred_check_branch
          %434 = sbr.rel (%p432) target = $region36
        $region35: #{tpu_custom_call.1} parent=11 // pred_region
          _
        $region36: #{tpu_custom_call.1} parent=11 // pred_fallthru
          _
        // Predicated region
        $region37: #{tpu_custom_call.1} parent=11 // pred_check
          %p435 = pneg %p247
        $region38: #{tpu_custom_call.1} parent=11 // pred_check_branch
          %437 = sbr.rel (%p435) target = $region40
        $region39: #{tpu_custom_call.1} parent=11 // pred_region
          _
        $region40: #{tpu_custom_call.1} parent=11 // pred_fallthru
          _
        // Predicated region
        $region41: #{tpu_custom_call.1} parent=11 // pred_check
          %p438 = pneg %p268
        $region42: #{tpu_custom_call.1} parent=11 // pred_check_branch
          %440 = sbr.rel (%p438) target = $region44
        $region43: #{tpu_custom_call.1} parent=11 // pred_region
          _
        $region44: #{tpu_custom_call.1} parent=11 // pred_fallthru
          _
        // Predicated region
        $region45: #{tpu_custom_call.1} parent=11 // pred_check
          %p441 = pneg %p289
        $region46: #{tpu_custom_call.1} parent=11 // pred_check_branch
          %443 = sbr.rel (%p441) target = $region48
        $region47: #{tpu_custom_call.1} parent=11 // pred_region
          _
        $region48: #{tpu_custom_call.1} parent=11 // pred_fallthru
          _
        // Predicated region
        $region49: #{tpu_custom_call.1} parent=11 // pred_check
          %p444 = pneg %p310
        $region50: #{tpu_custom_call.1} parent=11 // pred_check_branch
          %446 = sbr.rel (%p444) target = $region52
        $region51: #{tpu_custom_call.1} parent=11 // pred_region
          _
        $region52: #{tpu_custom_call.1} parent=11 // pred_fallthru
          _
      $region12: #{tpu_custom_call.1} parent=5 // pred_fallthru
        _
      %p447 = scmp.lt.s32.totalorder %s34, 2
      // Predicated region
      $region53: #{tpu_custom_call.1} parent=5 // pred_check
        %p448 = pneg %p447
      $region54: #{tpu_custom_call.1} parent=5 // pred_check_branch
        %450 = sbr.rel (%p448) target = $region56
      $region55: #{tpu_custom_call.1} parent=5 // pred_region
        // Predicated region
        $region57: #{tpu_custom_call.1} parent=55 // pred_check
          %p451 = pneg %p68
        $region58: #{tpu_custom_call.1} parent=55 // pred_check_branch
          %453 = sbr.rel (%p451) target = $region60
        $region59: #{tpu_custom_call.1} parent=55 // pred_region
          %s454 = sand.u32 %s58, 1
          %s455 = scalar_lea.sflag [#allocation4], %s454
          %s456 = sand.u32 %s58, 1
          %s457 = smul.addr %s456, 4
          %s458 = scalar_lea.vmem [#allocation3], %s457
          %s460 = ssub.s32 64, 64
          %461 = vsyncadd %s455, %s460
          %s462 = sadd.s32 %s42, %s41
          %s463 = smul.addr %s462, 64
          %s464 = scalar_lea.hbm %s0, %s463
          %s466 = sshll.u32 %s458, 4
          %s467 = int_to_ptr.vmem [resolvable:$true] %s466
          %469 = dma.hbm_to_vmem [thread:$0]  %s464, 64, %s467, %s455
        $region60: #{tpu_custom_call.1} parent=55 // pred_fallthru
          _
        // Predicated region
        $region61: #{tpu_custom_call.1} parent=55 // pred_check
          %p470 = pneg %p94
        $region62: #{tpu_custom_call.1} parent=55 // pred_check_branch
          %472 = sbr.rel (%p470) target = $region64
        $region63: #{tpu_custom_call.1} parent=55 // pred_region
          %s473 = sand.u32 %s34, 1
          %s474 = scalar_lea.sflag [#allocation7], %s473
          %s475 = sand.u32 %s84, 1
          %s476 = smul.addr %s475, 4
          %s477 = scalar_lea.vmem [#allocation6], %s476
          %s479 = ssub.s32 64, 64
          %480 = vsyncadd %s474, %s479
          %s481 = smul.addr %s41, 64
          %s482 = scalar_lea.hbm %s1, %s481
          %s484 = sshll.u32 %s477, 4
          %s485 = int_to_ptr.vmem [resolvable:$true] %s484
          %487 = dma.hbm_to_vmem [thread:$0]  %s482, 64, %s485, %s474
        $region64: #{tpu_custom_call.1} parent=55 // pred_fallthru
          _
      $region56: #{tpu_custom_call.1} parent=5 // pred_fallthru
        _
      %p488 = scmp.le.s32.totalorder 1, %s34
      %p489 = scmp.lt.s32.totalorder %s34, 3
      %p490 = pnand %p488, %p489
      %p491 = pneg %p490
      // Predicated region
      $region65: #{tpu_custom_call.1} parent=5 // pred_check
        _
      $region66: #{tpu_custom_call.1} parent=5 // pred_check_branch
        %493 = sbr.rel (%p490) target = $region68
      $region67: #{tpu_custom_call.1} parent=5 // pred_region
        %s494 = ssub.s32 %s34, 1
        %s495 = sand.u32 %s61, 1
        %s496 = scalar_lea.sflag [#allocation4], %s495
        %s497 = sand.u32 %s61, 1
        %s498 = smul.addr %s497, 4
        %s499 = scalar_lea.vmem [#allocation3], %s498
        // Predicated region
        $region69: #{tpu_custom_call.1} parent=67 // pred_check
          %p500 = pneg %p74
        $region70: #{tpu_custom_call.1} parent=67 // pred_check_branch
          %502 = sbr.rel (%p500) target = $region72
        $region71: #{tpu_custom_call.1} parent=67 // pred_region
          %503 = dma.done %s496, 64
        $region72: #{tpu_custom_call.1} parent=67 // pred_fallthru
          _
        %s504 = sand.u32 %s39, 1
        %s505 = scalar_lea.sflag [#allocation7], %s504
        %s506 = sand.u32 %s87, 1
        %s507 = smul.addr %s506, 4
        %s508 = scalar_lea.vmem [#allocation6], %s507
        // Predicated region
        $region73: #{tpu_custom_call.1} parent=67 // pred_check
          %p509 = pneg %p100
        $region74: #{tpu_custom_call.1} parent=67 // pred_check_branch
          %511 = sbr.rel (%p509) target = $region76
        $region75: #{tpu_custom_call.1} parent=67 // pred_region
          %512 = dma.done %s505, 64
        $region76: #{tpu_custom_call.1} parent=67 // pred_fallthru
          _
        // Predicated region
        $region77: #{tpu_custom_call.1} parent=67 // pred_check
          %p513 = pneg %p142
        $region78: #{tpu_custom_call.1} parent=67 // pred_check_branch
          %515 = sbr.rel (%p513) target = $region80
        $region79: #{tpu_custom_call.1} parent=67 // pred_region
          %516 = dma.done [#allocation7], 16
        $region80: #{tpu_custom_call.1} parent=67 // pred_fallthru
          _
        // Predicated region
        $region81: #{tpu_custom_call.1} parent=67 // pred_check
          %p517 = pneg %p163
        $region82: #{tpu_custom_call.1} parent=67 // pred_check_branch
          %519 = sbr.rel (%p517) target = $region84
        $region83: #{tpu_custom_call.1} parent=67 // pred_region
          %520 = dma.done [#allocation10], 256
        $region84: #{tpu_custom_call.1} parent=67 // pred_fallthru
          _
        // Predicated region
        $region85: #{tpu_custom_call.1} parent=67 // pred_check
          %p521 = pneg %p184
        $region86: #{tpu_custom_call.1} parent=67 // pred_check_branch
          %523 = sbr.rel (%p521) target = $region88
        $region87: #{tpu_custom_call.1} parent=67 // pred_region
          %524 = dma.done [#allocation10], 16
        $region88: #{tpu_custom_call.1} parent=67 // pred_fallthru
          _
        // Predicated region
        $region89: #{tpu_custom_call.1} parent=67 // pred_check
          %p525 = pneg %p205
        $region90: #{tpu_custom_call.1} parent=67 // pred_check_branch
          %527 = sbr.rel (%p525) target = $region92
        $region91: #{tpu_custom_call.1} parent=67 // pred_region
          %528 = dma.done [#allocation13], 256
        $region92: #{tpu_custom_call.1} parent=67 // pred_fallthru
          _
        %s529 = sand.u32 %s61, 1
        %s530 = scalar_lea.sflag [#allocation4], %s529
        %s531 = sand.u32 %s61, 1
        %s532 = smul.addr %s531, 4
        %s533 = scalar_lea.vmem [#allocation3], %s532
        %p534 = pneg %p74
        %p535 = pneg %p71
        %s536 = sand.u32 %s39, 1
        %s537 = scalar_lea.sflag [#allocation7], %s536
        %s538 = sand.u32 %s87, 1
        %s539 = smul.addr %s538, 4
        %s540 = scalar_lea.vmem [#allocation6], %s539
        %p541 = pneg %p100
        %p542 = pneg %p97
        %p543 = pneg %p121
        %p544 = pneg %p118
        %p545 = pneg %p142
        %p546 = pneg %p139
        %p547 = pneg %p163
        %p548 = pneg %p160
        %p549 = pneg %p184
        %p550 = pneg %p181
        %p551 = pneg %p205
        %p552 = pneg %p202
        %p553 = pneg %p226
        %p554 = pneg %p223
        %p555 = pneg %p247
        %p556 = pneg %p244
        %p557 = pneg %p268
        %p558 = pneg %p265
        %p559 = pneg %p289
        %p560 = pneg %p286
        %p561 = pneg %p310
        %p562 = pneg %p307
        %p563 = pneg %p338
        %p564 = pneg %p335
        %s565 = sand.u32 %s325, 1
        %s566 = scalar_lea.sflag [#allocation5], %s565
        %s567 = sand.u32 %s325, 1
        %s568 = smul.addr %s567, 8
        %s569 = scalar_lea.vmem [#allocation14], %s568
        %p570 = pneg %p366
        %p571 = pneg %p363
        %s572 = sand.u32 %s353, 1
        %s573 = scalar_lea.sflag [#allocation16], %s572
        %s574 = sand.u32 %s353, 1
        %s575 = smul.addr %s574, 8
        %s576 = scalar_lea.vmem [#allocation15], %s575
        %v578 = vld [vmem:[%s499] sm:$0xf]
        %v579 = vld [vmem:[%s508] sm:$0xf]
        %v580 = vld [vmem:[%s10] sm:$0xf]
        %v581 = vld [vmem:[%s10 + $0x4] sm:$0xf]
        %v582 = vld [vmem:[%s10 + $0x8] sm:$0xf]
        %v583 = vld [vmem:[%s10 + $0xc] sm:$0xf]
        %v584 = vld [vmem:[%s11] sm:$0x1]
        %v586 = vlaneseq
        %v587 = vshrl.u32 %v586, 7
        %v588 = vsub.s32 0, %v587
        %v589 = vrot.slane %v584, %v588
        %v595 = vunpack.c.l.b16 %v580
        %v596 = vunpack.c.l.b16 %v581
        %v597 = vunpack.c.l.b16 %v582
        %v598 = vunpack.c.l.b16 %v583
        %v599 = vpack.c.b16 %v596, %v595
        %v600 = vpack.c.b16 %v598, %v597
        %vm603 = vcmask 261120
        %v605 = vsel %vm603, %v578, 0
        %607 = vmatprep.subr.bf16.mxu0 0
        %608 = vmatpush1.bf16.msra.mxu0 0
        %609 = vmatprep.subr.bf16.mxu0 0
        %610 = vmatpush1.bf16.msra.mxu0 0
        %611 = vmatprep.subr.bf16.mxu0 0
        %612 = vmatpush1.bf16.msra.mxu0 0
        %613 = vmatprep.subr.bf16.mxu0 0
        %614 = vmatpush1.bf16.msra.mxu0 0
        %615 = vmatprep.subr.bf16.mxu0 0
        %616 = vmatpush1.bf16.msra.mxu0 0
        %617 = vmatprep.subr.bf16.mxu0 0
        %618 = vmatpush1.bf16.msra.mxu0 0
        %619 = vmatprep.subr.bf16.mxu0 0
        %620 = vmatpush1.bf16.msra.mxu0 %v600
        %621 = vmatprep.subr.bf16.mxu0 0
        %622 = vmatpush1.bf16.msra.mxu0 %v599
        %623 = vmatprep.subr.bf16.mxu0 0
        %624 = vmatpush2.bf16.msra.mxu0 0
        %625 = vmatprep.subr.bf16.mxu0 0
        %626 = vmatpush2.bf16.msra.mxu0 0
        %627 = vmatprep.subr.bf16.mxu0 0
        %628 = vmatpush2.bf16.msra.mxu0 0
        %629 = vmatprep.subr.bf16.mxu0 0
        %630 = vmatpush2.bf16.msra.mxu0 0
        %631 = vmatprep.subr.bf16.mxu0 0
        %632 = vmatpush2.bf16.msra.mxu0 0
        %633 = vmatprep.subr.bf16.mxu0 0
        %634 = vmatpush2.bf16.msra.mxu0 0
        %635 = vmatprep.subr.bf16.mxu0 0
        %636 = vmatpush2.bf16.msra.mxu0 0
        %637 = vmatprep.subr.bf16.mxu0 0
        %638 = vmatpush2.bf16.msra.mxu0 0
        %639 = vmatprep.mubr.bf16.mxu0 0
        %640 = vmatmul.mubr.bf16.gmra.mxu0 %v605
        %v641 = vpop.f32.mrf.mxu0
        %v642 = vadd.f32 %v589, %v641
        %v643 = vpop.f32.mrf.mxu0
        %v644 = vpop.f32.mrf.mxu0
        %v645 = vpop.f32.mrf.mxu0
        %646 = vdwg.mxu0
        %647 = vst [vmem:[%s576] sm:$0xff] %v642
        %v648 = vld [vmem:[%s2] sm:$0xf]
        %v649 = vld [vmem:[%s2 + $0x4] sm:$0xf]
        %v650 = vld [vmem:[%s2 + $0x8] sm:$0xf]
        %v651 = vld [vmem:[%s2 + $0xc] sm:$0xf]
        %v652 = vld [vmem:[#allocation8] sm:$0x1]
        %v654 = vlaneseq
        %v655 = vshrl.u32 %v654, 7
        %v656 = vsub.s32 0, %v655
        %v657 = vrot.slane %v652, %v656
        %v663 = vunpack.c.l.b16 %v648
        %v664 = vunpack.c.l.b16 %v649
        %v665 = vunpack.c.l.b16 %v650
        %v666 = vunpack.c.l.b16 %v651
        %v667 = vpack.c.b16 %v664, %v663
        %v668 = vpack.c.b16 %v666, %v665
        %671 = vmatprep.subr.bf16.mxu0 0
        %672 = vmatpush1.bf16.msra.mxu0 0
        %673 = vmatprep.subr.bf16.mxu0 0
        %674 = vmatpush1.bf16.msra.mxu0 0
        %675 = vmatprep.subr.bf16.mxu0 0
        %676 = vmatpush1.bf16.msra.mxu0 0
        %677 = vmatprep.subr.bf16.mxu0 0
        %678 = vmatpush1.bf16.msra.mxu0 0
        %679 = vmatprep.subr.bf16.mxu0 0
        %680 = vmatpush1.bf16.msra.mxu0 0
        %681 = vmatprep.subr.bf16.mxu0 0
        %682 = vmatpush1.bf16.msra.mxu0 0
        %683 = vmatprep.subr.bf16.mxu0 0
        %684 = vmatpush1.bf16.msra.mxu0 %v668
        %685 = vmatprep.subr.bf16.mxu0 0
        %686 = vmatpush1.bf16.msra.mxu0 %v667
        %687 = vmatprep.subr.bf16.mxu0 0
        %688 = vmatpush2.bf16.msra.mxu0 0
        %689 = vmatprep.subr.bf16.mxu0 0
        %690 = vmatpush2.bf16.msra.mxu0 0
        %691 = vmatprep.subr.bf16.mxu0 0
        %692 = vmatpush2.bf16.msra.mxu0 0
        %693 = vmatprep.subr.bf16.mxu0 0
        %694 = vmatpush2.bf16.msra.mxu0 0
        %695 = vmatprep.subr.bf16.mxu0 0
        %696 = vmatpush2.bf16.msra.mxu0 0
        %697 = vmatprep.subr.bf16.mxu0 0
        %698 = vmatpush2.bf16.msra.mxu0 0
        %699 = vmatprep.subr.bf16.mxu0 0
        %700 = vmatpush2.bf16.msra.mxu0 0
        %701 = vmatprep.subr.bf16.mxu0 0
        %702 = vmatpush2.bf16.msra.mxu0 0
        %703 = vmatprep.mubr.bf16.mxu0 0
        %704 = vmatmul.mubr.bf16.gmra.mxu0 %v605
        %v705 = vpop.f32.mrf.mxu0
        %v706 = vadd.f32 %v657, %v705
        %v707 = vpop.f32.mrf.mxu0
        %v708 = vpop.f32.mrf.mxu0
        %v709 = vpop.f32.mrf.mxu0
        %710 = vdwg.mxu0
        %v711 = vmul.f32 %v706, 0.5
        %v712 = vmul.f32 %v706, 0.70710677
        %vm713 = vcmp.ge.f32.partialorder %v712, 0.0
        %v714 = vsel %vm713, 1.0, -1.0
        %v715 = vand.u32 2147483647, %v712
        %v716 = vmul.f32 %v715, 0.3275911
        %v717 = vadd.f32 %v716, 1.0
        %v718 = vrcp.pop %v717
        %v719 = vmul.f32 1.0, %v718
        %v720 = vmul.f32 %v719, 1.0614054
        %v721 = vadd.f32 %v720, -1.4531521
        %v722 = vmul.f32 %v721, %v719
        %v723 = vadd.f32 %v722, 1.4214138
        %v724 = vmul.f32 %v723, %v719
        %v725 = vadd.f32 %v724, -0.28449672
        %v726 = vmul.f32 %v725, %v719
        %v727 = vadd.f32 %v726, 0.2548296
        %v728 = vmul.f32 %v727, %v719
        %v729 = vsub.f32 0.0, %v715
        %v730 = vmul.f32 %v729, %v715
        %v731 = vmul.f32 %v730, 1.442695
        %v732 = vpow.pop %v731
        %v733 = vmul.f32 %v728, %v732
        %v734 = vsub.f32 1.0, %v733
        %v735 = vmul.f32 %v714, %v734
        %v736 = vadd.f32 %v735, 1.0
        %v737 = vmul.f32 %v711, %v736
        %v738 = vld [vmem:[#allocation9] sm:$0xf]
        %v739 = vld [vmem:[#allocation9 + $0x4] sm:$0xf]
        %v740 = vld [vmem:[#allocation9 + $0x8] sm:$0xf]
        %v741 = vld [vmem:[#allocation9 + $0xc] sm:$0xf]
        %v742 = vld [vmem:[#allocation11] sm:$0x1]
        %v744 = vlaneseq
        %v745 = vshrl.u32 %v744, 7
        %v746 = vsub.s32 0, %v745
        %v747 = vrot.slane %v742, %v746
        %v753 = vunpack.c.l.b16 %v738
        %v754 = vunpack.c.l.b16 %v739
        %v755 = vunpack.c.l.b16 %v740
        %v756 = vunpack.c.l.b16 %v741
        %v757 = vpack.c.b16 %v754, %v753
        %v758 = vpack.c.b16 %v756, %v755
        %v762 = vsel %vm603, %v579, 0
        %764 = vmatprep.subr.bf16.mxu0 0
        %765 = vmatpush1.bf16.msra.mxu0 0
        %766 = vmatprep.subr.bf16.mxu0 0
        %767 = vmatpush1.bf16.msra.mxu0 0
        %768 = vmatprep.subr.bf16.mxu0 0
        %769 = vmatpush1.bf16.msra.mxu0 0
        %770 = vmatprep.subr.bf16.mxu0 0
        %771 = vmatpush1.bf16.msra.mxu0 0
        %772 = vmatprep.subr.bf16.mxu0 0
        %773 = vmatpush1.bf16.msra.mxu0 0
        %774 = vmatprep.subr.bf16.mxu0 0
        %775 = vmatpush1.bf16.msra.mxu0 0
        %776 = vmatprep.subr.bf16.mxu0 0
        %777 = vmatpush1.bf16.msra.mxu0 %v758
        %778 = vmatprep.subr.bf16.mxu0 0
        %779 = vmatpush1.bf16.msra.mxu0 %v757
        %780 = vmatprep.subr.bf16.mxu0 0
        %781 = vmatpush2.bf16.msra.mxu0 0
        %782 = vmatprep.subr.bf16.mxu0 0
        %783 = vmatpush2.bf16.msra.mxu0 0
        %784 = vmatprep.subr.bf16.mxu0 0
        %785 = vmatpush2.bf16.msra.mxu0 0
        %786 = vmatprep.subr.bf16.mxu0 0
        %787 = vmatpush2.bf16.msra.mxu0 0
        %788 = vmatprep.subr.bf16.mxu0 0
        %789 = vmatpush2.bf16.msra.mxu0 0
        %790 = vmatprep.subr.bf16.mxu0 0
        %791 = vmatpush2.bf16.msra.mxu0 0
        %792 = vmatprep.subr.bf16.mxu0 0
        %793 = vmatpush2.bf16.msra.mxu0 0
        %794 = vmatprep.subr.bf16.mxu0 0
        %795 = vmatpush2.bf16.msra.mxu0 0
        %796 = vmatprep.mubr.bf16.mxu0 0
        %797 = vmatmul.mubr.bf16.gmra.mxu0 %v762
        %v798 = vpop.f32.mrf.mxu0
        %v799 = vadd.f32 %v747, %v798
        %v800 = vpop.f32.mrf.mxu0
        %v801 = vpop.f32.mrf.mxu0
        %v802 = vpop.f32.mrf.mxu0
        %803 = vdwg.mxu0
        %v804 = vmul.f32 %v799, 0.5
        %v805 = vmul.f32 %v799, 0.70710677
        %vm806 = vcmp.ge.f32.partialorder %v805, 0.0
        %v807 = vsel %vm806, 1.0, -1.0
        %v808 = vand.u32 2147483647, %v805
        %v809 = vmul.f32 %v808, 0.3275911
        %v810 = vadd.f32 %v809, 1.0
        %v811 = vrcp.pop %v810
        %v812 = vmul.f32 1.0, %v811
        %v813 = vmul.f32 %v812, 1.0614054
        %v814 = vadd.f32 %v813, -1.4531521
        %v815 = vmul.f32 %v814, %v812
        %v816 = vadd.f32 %v815, 1.4214138
        %v817 = vmul.f32 %v816, %v812
        %v818 = vadd.f32 %v817, -0.28449672
        %v819 = vmul.f32 %v818, %v812
        %v820 = vadd.f32 %v819, 0.2548296
        %v821 = vmul.f32 %v820, %v812
        %v822 = vsub.f32 0.0, %v808
        %v823 = vmul.f32 %v822, %v808
        %v824 = vmul.f32 %v823, 1.442695
        %v825 = vpow.pop %v824
        %v826 = vmul.f32 %v821, %v825
        %v827 = vsub.f32 1.0, %v826
        %v828 = vmul.f32 %v807, %v827
        %v829 = vadd.f32 %v828, 1.0
        %v830 = vmul.f32 %v804, %v829
        %v831 = vpack.c.bf16 %v737, %v737
        %832 = vxpose.xlu0.b32.start [1/16] %v830, 128
        %833 = vxpose.xlu0.b32.cont [2/16] 0.0, 128
        %834 = vxpose.xlu0.b32.cont [3/16] 0.0, 128
        %835 = vxpose.xlu0.b32.cont [4/16] 0.0, 128
        %836 = vxpose.xlu0.b32.cont [5/16] 0.0, 128
        %837 = vxpose.xlu0.b32.cont [6/16] 0.0, 128
        %838 = vxpose.xlu0.b32.cont [7/16] 0.0, 128
        %839 = vxpose.xlu0.b32.cont [8/16] 0.0, 128
        %840 = vxpose.xlu0.b32.cont [9/16] 0.0, 128
        %841 = vxpose.xlu0.b32.cont [10/16] 0.0, 128
        %842 = vxpose.xlu0.b32.cont [11/16] 0.0, 128
        %843 = vxpose.xlu0.b32.cont [12/16] 0.0, 128
        %844 = vxpose.xlu0.b32.cont [13/16] 0.0, 128
        %845 = vxpose.xlu0.b32.cont [14/16] 0.0, 128
        %846 = vxpose.xlu0.b32.cont [15/16] 0.0, 128
        %847 = vxpose.xlu0.b32.end [16/16] 0.0, 128
        %v848 = vpop.trf.xlu0
        %v849 = vpop.trf.xlu0
        %v850 = vpop.trf.xlu0
        %v851 = vpop.trf.xlu0
        %v852 = vpop.trf.xlu0
        %v853 = vpop.trf.xlu0
        %v854 = vpop.trf.xlu0
        %v855 = vpop.trf.xlu0
        %v856 = vpop.trf.xlu0
        %v857 = vpop.trf.xlu0
        %v858 = vpop.trf.xlu0
        %v859 = vpop.trf.xlu0
        %v860 = vpop.trf.xlu0
        %v861 = vpop.trf.xlu0
        %v862 = vpop.trf.xlu0
        %v863 = vpop.trf.xlu0
        %v864 = vpack.c.bf16 %v849, %v848
        %v865 = vpack.c.bf16 %v851, %v850
        %v866 = vld [vmem:[#allocation12] sm:$0xf]
        %v867 = vld [vmem:[#allocation12 + $0x4] sm:$0xf]
        %v868 = vld [vmem:[#allocation12 + $0x8] sm:$0xf]
        %v869 = vld [vmem:[#allocation12 + $0xc] sm:$0xf]
        %v874 = vunpack.c.l.b16 %v866
        %v875 = vunpack.c.l.b16 %v867
        %v876 = vunpack.c.l.b16 %v868
        %v877 = vunpack.c.l.b16 %v869
        %v878 = vpack.c.b16 %v875, %v874
        %v879 = vpack.c.b16 %v877, %v876
        %v883 = vsel %vm603, %v831, 0
        %885 = vmatprep.subr.bf16.mxu0 0
        %886 = vmatpush1.bf16.msra.mxu0 0
        %887 = vmatprep.subr.bf16.mxu0 0
        %888 = vmatpush1.bf16.msra.mxu0 0
        %889 = vmatprep.subr.bf16.mxu0 0
        %890 = vmatpush1.bf16.msra.mxu0 0
        %891 = vmatprep.subr.bf16.mxu0 0
        %892 = vmatpush1.bf16.msra.mxu0 0
        %893 = vmatprep.subr.bf16.mxu0 0
        %894 = vmatpush1.bf16.msra.mxu0 0
        %895 = vmatprep.subr.bf16.mxu0 0
        %896 = vmatpush1.bf16.msra.mxu0 0
        %897 = vmatprep.subr.bf16.mxu0 0
        %898 = vmatpush1.bf16.msra.mxu0 %v879
        %899 = vmatprep.subr.bf16.mxu0 0
        %900 = vmatpush1.bf16.msra.mxu0 %v878
        %901 = vmatprep.subr.bf16.mxu0 0
        %902 = vmatpush2.bf16.msra.mxu0 0
        %903 = vmatprep.subr.bf16.mxu0 0
        %904 = vmatpush2.bf16.msra.mxu0 0
        %905 = vmatprep.subr.bf16.mxu0 0
        %906 = vmatpush2.bf16.msra.mxu0 0
        %907 = vmatprep.subr.bf16.mxu0 0
        %908 = vmatpush2.bf16.msra.mxu0 0
        %909 = vmatprep.subr.bf16.mxu0 0
        %910 = vmatpush2.bf16.msra.mxu0 0
        %911 = vmatprep.subr.bf16.mxu0 0
        %912 = vmatpush2.bf16.msra.mxu0 0
        %913 = vmatprep.subr.bf16.mxu0 0
        %914 = vmatpush2.bf16.msra.mxu0 0
        %915 = vmatprep.subr.bf16.mxu0 0
        %916 = vmatpush2.bf16.msra.mxu0 0
        %917 = vmatprep.mubr.bf16.mxu0 0
        %918 = vmatmul.mubr.bf16.gmra.mxu0 %v883
        %v919 = vpop.f32.mrf.mxu0
        %v920 = vadd.f32 0.0, %v919
        %v921 = vpop.f32.mrf.mxu0
        %v922 = vpop.f32.mrf.mxu0
        %v923 = vpop.f32.mrf.mxu0
        %924 = vdwg.mxu0
        %v925 = vld [vmem:[%s7] sm:$0xf]
        %v926 = vld [vmem:[%s7 + $0x4] sm:$0xf]
        %v927 = vld [vmem:[%s7 + $0x8] sm:$0xf]
        %v928 = vld [vmem:[%s7 + $0xc] sm:$0xf]
        %v933 = vunpack.c.l.b16 %v925
        %v934 = vunpack.c.l.b16 %v926
        %v935 = vunpack.c.l.b16 %v927
        %v936 = vunpack.c.l.b16 %v928
        %v937 = vpack.c.b16 %v934, %v933
        %v938 = vpack.c.b16 %v936, %v935
        %941 = vmatprep.subr.bf16.mxu0 0
        %942 = vmatpush1.bf16.msra.mxu0 0
        %943 = vmatprep.subr.bf16.mxu0 0
        %944 = vmatpush1.bf16.msra.mxu0 0
        %945 = vmatprep.subr.bf16.mxu0 0
        %946 = vmatpush1.bf16.msra.mxu0 0
        %947 = vmatprep.subr.bf16.mxu0 0
        %948 = vmatpush1.bf16.msra.mxu0 0
        %949 = vmatprep.subr.bf16.mxu0 0
        %950 = vmatpush1.bf16.msra.mxu0 0
        %951 = vmatprep.subr.bf16.mxu0 0
        %952 = vmatpush1.bf16.msra.mxu0 0
        %953 = vmatprep.subr.bf16.mxu0 0
        %954 = vmatpush1.bf16.msra.mxu0 %v938
        %955 = vmatprep.subr.bf16.mxu0 0
        %956 = vmatpush1.bf16.msra.mxu0 %v937
        %957 = vmatprep.subr.bf16.mxu0 0
        %958 = vmatpush2.bf16.msra.mxu0 0
        %959 = vmatprep.subr.bf16.mxu0 0
        %960 = vmatpush2.bf16.msra.mxu0 0
        %961 = vmatprep.subr.bf16.mxu0 0
        %962 = vmatpush2.bf16.msra.mxu0 0
        %963 = vmatprep.subr.bf16.mxu0 0
        %964 = vmatpush2.bf16.msra.mxu0 0
        %965 = vmatprep.subr.bf16.mxu0 0
        %966 = vmatpush2.bf16.msra.mxu0 0
        %967 = vmatprep.subr.bf16.mxu0 0
        %968 = vmatpush2.bf16.msra.mxu0 0
        %969 = vmatprep.subr.bf16.mxu0 0
        %970 = vmatpush2.bf16.msra.mxu0 0
        %971 = vmatprep.subr.bf16.mxu0 0
        %972 = vmatpush2.bf16.msra.mxu0 0
        %973 = vmatprep.mubr.bf16.mxu0 0
        %974 = vmatmul.mubr.bf16.gmra.mxu0 %v883
        %v975 = vpop.f32.mrf.mxu0
        %v976 = vadd.f32 0.0, %v975
        %v977 = vpop.f32.mrf.mxu0
        %v978 = vpop.f32.mrf.mxu0
        %v979 = vpop.f32.mrf.mxu0
        %980 = vdwg.mxu0
        %v981 = vld [vmem:[%s8] sm:$0x1]
        %v982 = vld [vmem:[%s9] sm:$0x3]
        %984 = vset.pattern.permute.xlu0 0
        %985 = vperm.xlu0 %984, %v982
        %v986 = vpop.permute.xlu0 %985
        %v989 = vsel %vm603, %v981, 0
        %991 = vmatprep.subr.bf16.mxu0 0
        %992 = vmatpush1.bf16.msra.mxu0 0
        %993 = vmatprep.subr.bf16.mxu0 0
        %994 = vmatpush1.bf16.msra.mxu0 0
        %995 = vmatprep.subr.bf16.mxu0 0
        %996 = vmatpush1.bf16.msra.mxu0 0
        %997 = vmatprep.subr.bf16.mxu0 0
        %998 = vmatpush1.bf16.msra.mxu0 0
        %999 = vmatprep.subr.bf16.mxu0 0
        %1000 = vmatpush1.bf16.msra.mxu0 0
        %1001 = vmatprep.subr.bf16.mxu0 0
        %1002 = vmatpush1.bf16.msra.mxu0 0
        %1003 = vmatprep.subr.bf16.mxu0 0
        %1004 = vmatpush1.bf16.msra.mxu0 %v865
        %1005 = vmatprep.subr.bf16.mxu0 0
        %1006 = vmatpush1.bf16.msra.mxu0 %v864
        %1007 = vmatprep.subr.bf16.mxu0 0
        %1008 = vmatpush2.bf16.msra.mxu0 0
        %1009 = vmatprep.subr.bf16.mxu0 0
        %1010 = vmatpush2.bf16.msra.mxu0 0
        %1011 = vmatprep.subr.bf16.mxu0 0
        %1012 = vmatpush2.bf16.msra.mxu0 0
        %1013 = vmatprep.subr.bf16.mxu0 0
        %1014 = vmatpush2.bf16.msra.mxu0 0
        %1015 = vmatprep.subr.bf16.mxu0 0
        %1016 = vmatpush2.bf16.msra.mxu0 0
        %1017 = vmatprep.subr.bf16.mxu0 0
        %1018 = vmatpush2.bf16.msra.mxu0 0
        %1019 = vmatprep.subr.bf16.mxu0 0
        %1020 = vmatpush2.bf16.msra.mxu0 0
        %1021 = vmatprep.subr.bf16.mxu0 0
        %1022 = vmatpush2.bf16.msra.mxu0 0
        %1023 = vmatprep.mubr.bf16.mxu0 0
        %1024 = vmatmul.mubr.bf16.gmra.mxu0 %v989
        %v1025 = vpop.f32.mrf.mxu0
        %v1026 = vadd.f32 %v986, %v1025
        %v1027 = vpop.f32.mrf.mxu0
        %v1028 = vpop.f32.mrf.mxu0
        %v1029 = vpop.f32.mrf.mxu0
        %1030 = vdwg.mxu0
        %v1031 = vpack.c.bf16 %v920, %v920
        %1033 = vset.pattern.permute.xlu0 0
        %1034 = vperm.xlu0 %1033, %v976
        %v1035 = vpop.permute.xlu0 %1034
        %v1038 = vsel %vm603, %v1031, 0
        %1040 = vmatprep.subr.bf16.mxu0 0
        %1041 = vmatpush1.bf16.msra.mxu0 0
        %1042 = vmatprep.subr.bf16.mxu0 0
        %1043 = vmatpush1.bf16.msra.mxu0 0
        %1044 = vmatprep.subr.bf16.mxu0 0
        %1045 = vmatpush1.bf16.msra.mxu0 0
        %1046 = vmatprep.subr.bf16.mxu0 0
        %1047 = vmatpush1.bf16.msra.mxu0 0
        %1048 = vmatprep.subr.bf16.mxu0 0
        %1049 = vmatpush1.bf16.msra.mxu0 0
        %1050 = vmatprep.subr.bf16.mxu0 0
        %1051 = vmatpush1.bf16.msra.mxu0 0
        %1052 = vmatprep.subr.bf16.mxu0 0
        %1053 = vmatpush1.bf16.msra.mxu0 %v865
        %1054 = vmatprep.subr.bf16.mxu0 0
        %1055 = vmatpush1.bf16.msra.mxu0 %v864
        %1056 = vmatprep.subr.bf16.mxu0 0
        %1057 = vmatpush2.bf16.msra.mxu0 0
        %1058 = vmatprep.subr.bf16.mxu0 0
        %1059 = vmatpush2.bf16.msra.mxu0 0
        %1060 = vmatprep.subr.bf16.mxu0 0
        %1061 = vmatpush2.bf16.msra.mxu0 0
        %1062 = vmatprep.subr.bf16.mxu0 0
        %1063 = vmatpush2.bf16.msra.mxu0 0
        %1064 = vmatprep.subr.bf16.mxu0 0
        %1065 = vmatpush2.bf16.msra.mxu0 0
        %1066 = vmatprep.subr.bf16.mxu0 0
        %1067 = vmatpush2.bf16.msra.mxu0 0
        %1068 = vmatprep.subr.bf16.mxu0 0
        %1069 = vmatpush2.bf16.msra.mxu0 0
        %1070 = vmatprep.subr.bf16.mxu0 0
        %1071 = vmatpush2.bf16.msra.mxu0 0
        %1072 = vmatprep.mubr.bf16.mxu0 0
        %1073 = vmatmul.mubr.bf16.gmra.mxu0 %v1038
        %v1074 = vpop.f32.mrf.mxu0
        %v1075 = vadd.f32 %v1035, %v1074
        %v1076 = vpop.f32.mrf.mxu0
        %v1077 = vpop.f32.mrf.mxu0
        %v1078 = vpop.f32.mrf.mxu0
        %1079 = vdwg.mxu0
        %v1080 = vlaneseq
        %v1081 = vshrl.u32 %v1080, 7
        %v1082 = vsub.s32 0, %v1081
        %v1083 = vrot.slane %v1026, %v1082
        %v1084 = vadd.f32 %v1075, %v1083
        %vm1085 = vcmask 64512
        %1086 = vst.msk [vmem:[#allocation2] sm:$0xff] %vm1085, %v1084
        %1087 = vset.pattern.permute.xlu0 1
        %1088 = vperm.xlu0 %1087, %v976
        %v1089 = vpop.permute.xlu0 %1088
        %1092 = vrot.lane.b32.xlu0 %v1031, 96
        %v1093 = vpop.permute.xlu0 %1092
        %v1095 = vsel %vm603, %v1093, 0
        %1097 = vmatprep.subr.bf16.mxu0 0
        %1098 = vmatpush1.bf16.msra.mxu0 0
        %1099 = vmatprep.subr.bf16.mxu0 0
        %1100 = vmatpush1.bf16.msra.mxu0 0
        %1101 = vmatprep.subr.bf16.mxu0 0
        %1102 = vmatpush1.bf16.msra.mxu0 0
        %1103 = vmatprep.subr.bf16.mxu0 0
        %1104 = vmatpush1.bf16.msra.mxu0 0
        %1105 = vmatprep.subr.bf16.mxu0 0
        %1106 = vmatpush1.bf16.msra.mxu0 0
        %1107 = vmatprep.subr.bf16.mxu0 0
        %1108 = vmatpush1.bf16.msra.mxu0 0
        %1109 = vmatprep.subr.bf16.mxu0 0
        %1110 = vmatpush1.bf16.msra.mxu0 %v865
        %1111 = vmatprep.subr.bf16.mxu0 0
        %1112 = vmatpush1.bf16.msra.mxu0 %v864
        %1113 = vmatprep.subr.bf16.mxu0 0
        %1114 = vmatpush2.bf16.msra.mxu0 0
        %1115 = vmatprep.subr.bf16.mxu0 0
        %1116 = vmatpush2.bf16.msra.mxu0 0
        %1117 = vmatprep.subr.bf16.mxu0 0
        %1118 = vmatpush2.bf16.msra.mxu0 0
        %1119 = vmatprep.subr.bf16.mxu0 0
        %1120 = vmatpush2.bf16.msra.mxu0 0
        %1121 = vmatprep.subr.bf16.mxu0 0
        %1122 = vmatpush2.bf16.msra.mxu0 0
        %1123 = vmatprep.subr.bf16.mxu0 0
        %1124 = vmatpush2.bf16.msra.mxu0 0
        %1125 = vmatprep.subr.bf16.mxu0 0
        %1126 = vmatpush2.bf16.msra.mxu0 0
        %1127 = vmatprep.subr.bf16.mxu0 0
        %1128 = vmatpush2.bf16.msra.mxu0 0
        %1129 = vmatprep.mubr.bf16.mxu0 0
        %1130 = vmatmul.mubr.bf16.gmra.mxu0 %v1095
        %v1131 = vpop.f32.mrf.mxu0
        %v1132 = vadd.f32 %v1089, %v1131
        %v1133 = vpop.f32.mrf.mxu0
        %v1134 = vpop.f32.mrf.mxu0
        %v1135 = vpop.f32.mrf.mxu0
        %1136 = vdwg.mxu0
        %v1137 = vlaneseq
        %v1138 = vshrl.u32 %v1137, 7
        %v1139 = vsub.s32 1, %v1138
        %v1140 = vrot.slane %v1026, %v1139
        %v1141 = vadd.f32 %v1132, %v1140
        %s1142 = scalar_lea.vmem [#allocation2], 8
        %1143 = vst.msk [vmem:[%s1142] sm:$0xff] %vm1085, %v1141
        %v1144 = vld [vmem:[#allocation2] sm:$0xff]
        %v1145 = vld [vmem:[%s1142] sm:$0xff]
        %v1146 = vmax.f32 %v1144, %v1145
        %v1147 = vsub.f32 %v1144, %v1146
        %v1148 = vmul.f32 %v1147, 1.442695
        %v1149 = vpow.pop %v1148
        %1150 = vst.msk [vmem:[#allocation2] sm:$0xff] %vm1085, %v1149
        %v1151 = vadd.f32 %v1149, 0.0
        %v1152 = vld [vmem:[%s1142] sm:$0xff]
        %v1153 = vsub.f32 %v1152, %v1146
        %v1154 = vmul.f32 %v1153, 1.442695
        %v1155 = vpow.pop %v1154
        %1156 = vst.msk [vmem:[%s1142] sm:$0xff] %vm1085, %v1155
        %v1157 = vadd.f32 %v1151, %v1155
        %v1158 = vrcp.pop %v1157
        %v1159 = vld [vmem:[#allocation2] sm:$0xff]
        %v1160 = vmul.f32 %v1159, %v1158
        %v1161 = vpack.c.bf16 %v1160, %v1160
        %vm1162 = vcmask 60416
        %1163 = vst.msk [vmem:[%s569] sm:$0xf] %vm1162, %v1161
        %v1164 = vld [vmem:[%s1142] sm:$0xff]
        %v1165 = vmul.f32 %v1164, %v1158
        %v1166 = vpack.c.bf16 %v1165, %v1165
        %s1167 = scalar_lea.vmem %s569, 4 [#allocation14]
        %1168 = vst.msk [vmem:[%s1167] sm:$0xf] %vm1162, %v1166
        %s1169 = sand.u32 %s325, 1
        %s1170 = scalar_lea.sflag [#allocation5], %s1169
        %s1171 = sand.u32 %s325, 1
        %s1172 = smul.addr %s1171, 8
        %s1173 = scalar_lea.vmem [#allocation14], %s1172
        %s1174 = sand.u32 %s353, 1
        %s1175 = scalar_lea.sflag [#allocation16], %s1174
        %s1176 = sand.u32 %s353, 1
        %s1177 = smul.addr %s1176, 8
        %s1178 = scalar_lea.vmem [#allocation15], %s1177
        // Predicated region
        $region93: #{tpu_custom_call.1} parent=67 // pred_check
          %p1179 = pneg %p335
        $region94: #{tpu_custom_call.1} parent=67 // pred_check_branch
          %1181 = sbr.rel (%p1179) target = $region96
        $region95: #{tpu_custom_call.1} parent=67 // pred_region
          %s1183 = ssub.s32 128, 128
          %1184 = vsyncadd %s1170, %s1183
          %s1185 = smul.addr %s43, 2
          %s1186 = sadd.s32 %s44, %s1185
          %s1187 = smul.addr %s1186, 64
          %s1188 = scalar_lea.hbm %s12, %s1187
          %s1189 = sshll.u32 %s1173, 4
          %s1190 = int_to_ptr.vmem [resolvable:$true] %s1189
          %1195 = dma.vmem_to_hbm [thread:$0]  %s1190, 128, %s1188, %s1170, 64, 64, 4
        $region96: #{tpu_custom_call.1} parent=67 // pred_fallthru
          _
        // Predicated region
        $region97: #{tpu_custom_call.1} parent=67 // pred_check
          %p1196 = pneg %p363
        $region98: #{tpu_custom_call.1} parent=67 // pred_check_branch
          %1198 = sbr.rel (%p1196) target = $region100
        $region99: #{tpu_custom_call.1} parent=67 // pred_region
          %s1200 = ssub.s32 128, 128
          %1201 = vsyncadd %s1175, %s1200
          %s1202 = sadd.s32 %s44, %s43
          %s1203 = smul.addr %s1202, 128
          %s1204 = scalar_lea.hbm %s13, %s1203
          %s1206 = sshll.u32 %s1178, 4
          %s1207 = int_to_ptr.vmem [resolvable:$true] %s1206
          %1209 = dma.vmem_to_hbm [thread:$0]  %s1207, 128, %s1204, %s1175
        $region100: #{tpu_custom_call.1} parent=67 // pred_fallthru
          _
      $region68: #{tpu_custom_call.1} parent=5 // pred_fallthru
        _
      %p1210 = scmp.le.s32.totalorder 2, %s34
      // Predicated region
      $region101: #{tpu_custom_call.1} parent=5 // pred_check
        %p1211 = pneg %p1210
      $region102: #{tpu_custom_call.1} parent=5 // pred_check_branch
        %1213 = sbr.rel (%p1211) target = $region104
      $region103: #{tpu_custom_call.1} parent=5 // pred_region
        %s1214 = ssub.s32 %s34, 2
        // Predicated region
        $region105: #{tpu_custom_call.1} parent=103 // pred_check
          %p1215 = pneg %p341
        $region106: #{tpu_custom_call.1} parent=103 // pred_check_branch
          %1217 = sbr.rel (%p1215) target = $region108
        $region107: #{tpu_custom_call.1} parent=103 // pred_region
          %s1218 = sand.u32 %s326, 1
          %s1219 = scalar_lea.sflag [#allocation5], %s1218
          %s1220 = sand.u32 %s326, 1
          %s1221 = smul.addr %s1220, 8
          %s1222 = scalar_lea.vmem [#allocation14], %s1221
          %1223 = dma.done %s1219, 128
        $region108: #{tpu_custom_call.1} parent=103 // pred_fallthru
          _
        // Predicated region
        $region109: #{tpu_custom_call.1} parent=103 // pred_check
          %p1224 = pneg %p369
        $region110: #{tpu_custom_call.1} parent=103 // pred_check_branch
          %1226 = sbr.rel (%p1224) target = $region112
        $region111: #{tpu_custom_call.1} parent=103 // pred_region
          %s1227 = sand.u32 %s354, 1
          %s1228 = scalar_lea.sflag [#allocation16], %s1227
          %s1229 = sand.u32 %s354, 1
          %s1230 = smul.addr %s1229, 8
          %s1231 = scalar_lea.vmem [#allocation15], %s1230
          %1232 = dma.done %s1228, 128
        $region112: #{tpu_custom_call.1} parent=103 // pred_fallthru
          _
      $region104: #{tpu_custom_call.1} parent=5 // pred_fallthru
        _
    $region6: #{tpu_custom_call.1} parent=1 // loop_footer
      %s38 = sadd.s32 1, %s34
    $region7: #{tpu_custom_call.1} parent=1 // loop_footer_branch
      %33 = sbr.rel target = $region3
    $region8: #{tpu_custom_call.1} parent=1 // loop_exit
      _
    %1233 = vsyncpa [#allocation4], 1
    %s1234 = scalar_lea.sflag [#allocation4], 1
    %1235 = vsyncpa %s1234, 1
    %1236 = vsyncpa [#allocation7], 1
    %s1237 = scalar_lea.sflag [#allocation7], 1
    %1238 = vsyncpa %s1237, 1
    %1239 = vsyncpa [#allocation10], 1
    %1240 = vsyncpa [#allocation13], 1
    %1241 = vsyncpa [#allocation5], 1
    %s1242 = scalar_lea.sflag [#allocation5], 1
    %1243 = vsyncpa %s1242, 1
    %1244 = vsyncpa [#allocation16], 1
    %s1245 = scalar_lea.sflag [#allocation16], 1
    %1246 = vsyncpa %s1245, 1

</llo_original>
